<compile_context>
chip_gen: v5e
topology: v5e:2x2
jax: 0.10.0
libtpu: 0.0.40
codegen_flags: <defaults>
</compile_context>

<pallas_src>
import functools

import jax
import jax.numpy as jnp
from jax import lax
from jax.experimental import pallas as pl
from jax.experimental.pallas import tpu as pltpu

_LANES = 128
_SLACK_BYTES = 4 * 1024 * 1024


# --------------------------------------------------------------------------- #
# Kernel
# --------------------------------------------------------------------------- #
def reward_kernel(x_ref, w1_ref, b1_ref, w2_ref, b2_ref, out_ref, acc_ref,
                  *, seq_len, s_tile):
    # x_ref:  (b_tile, s_tile, H)          w1_ref: (H, H2)
    # b1_ref: (1, H2) f32                  w2_ref: (1, H2) f32 (row of W2)
    # b2_ref: (1, 1) f32                   out_ref: (b_tile, 128) f32
    # acc_ref: (b_tile, H) f32 scratch (persists across the S grid axis)
    s = pl.program_id(1)
    last = pl.num_programs(1) - 1

    @pl.when(s == 0)
    def _init():
        acc_ref[...] = jnp.zeros_like(acc_ref)

    ragged = (seq_len % s_tile) != 0  # static (Python) predicate

    if ragged:
        # Steady-state tiles: plain f32 accumulation, no masking work.
        @pl.when(s != last)
        def _accumulate_plain():
            acc_ref[...] += jnp.sum(x_ref[...].astype(jnp.float32), axis=1)

        # Only the last tile masks its padded rows (select, NOT multiply, so
        # garbage/NaN in the out-of-bounds rows never propagates).
        @pl.when(s == last)
        def _accumulate_masked():
            x = x_ref[...].astype(jnp.float32)
            row = s * s_tile + lax.broadcasted_iota(jnp.int32, (1, s_tile, 1), 1)
            x = jnp.where(row < seq_len, x, 0.0)
            acc_ref[...] += jnp.sum(x, axis=1)
    else:
        acc_ref[...] += jnp.sum(x_ref[...].astype(jnp.float32), axis=1)

    @pl.when(s == last)
    def _finalize():
        pooled = acc_ref[...] * (1.0 / float(seq_len))  # divide by the true S
        # Linear(H, H//2) on the MXU, f32 accumulation.
        h = jnp.dot(pooled.astype(w1_ref.dtype), w1_ref[...],
                    preferred_element_type=jnp.float32)
        h = jnp.maximum(h + b1_ref[...], 0.0)  # ReLU; Dropout(0.1) = identity (eval)
        # Linear(H//2, 1): N=1 -> VPU multiply + lane reduction instead of MXU.
        r = jnp.sum(h * w2_ref[...], axis=-1, keepdims=True) + b2_ref[...]
        # Lane-dense store: broadcast the scalar reward across 128 lanes.
        out_ref[...] = jnp.broadcast_to(r, out_ref.shape).astype(out_ref.dtype)


# --------------------------------------------------------------------------- #
# Sizing helpers
# --------------------------------------------------------------------------- #
def _tpu_vmem_and_dualtc():
    """(per-core VMEM bytes, is-dual-TensorCore-chip) with safe fallbacks."""
    vmem_cap = 128 * 1024 * 1024
    dual_tc = False
    try:
        vmem_cap = int(pltpu.get_tpu_info().vmem_capacity_bytes)
    except Exception:
        pass
    try:
        if "v7" in jax.devices()[0].device_kind.lower():
            dual_tc = True
    except Exception:
        pass
    if vmem_cap <= 64 * 1024 * 1024:   # 64 MiB/TC => v7x-class part
        dual_tc = True
    return vmem_cap, dual_tc


def _pick_s_tile(seq_len, b_tile, hidden, x_itemsize, budget_bytes, row_gran):
    """Largest row_gran-multiple sequence tile whose double-buffered block fits."""
    if 2 * b_tile * seq_len * hidden * x_itemsize <= budget_bytes:
        return seq_len
    per_row = 2 * b_tile * hidden * x_itemsize
    rows = budget_bytes // max(per_row, 1)
    s_tile = max(row_gran, (rows // row_gran) * row_gran)
    return min(s_tile, seq_len)


def prepare_reward_head_params(w1, b1, w2, b2, w1_dtype=None):
    """One-time (init-time) weight formatting: cast/reshape outside the fwd path.

    w1: (H, H2), b1: (H2,), w2: (H2, 1), b2: (1,).
    """
    H, H2 = w1.shape
    if w1_dtype is None:
        vmem_cap, _ = _tpu_vmem_and_dualtc()
        # Keep f32 accuracy unless the f32 weight would eat too much VMEM
        # (only a concern on v7x at production hidden sizes).
        w1_dtype = jnp.float32 if H * H2 * 4 <= vmem_cap // 8 else jnp.bfloat16
    return (jnp.asarray(w1).astype(w1_dtype),
            jnp.asarray(b1).astype(jnp.float32).reshape(1, H2),
            jnp.asarray(w2).astype(jnp.float32).reshape(1, H2),
            jnp.asarray(b2).astype(jnp.float32).reshape(1, 1))


# --------------------------------------------------------------------------- #
# Forward wrapper
# --------------------------------------------------------------------------- #
def qwen_reward_forward(hidden_states, params, *, s_tile=None, b_tile=None):
    """hidden_states: (B, S, H); params = prepare_reward_head_params(...)."""
    w1f, b1f, w2f, b2f = params
    B, S, H = hidden_states.shape
    H2 = w1f.shape[1]

    x_itemsize = jnp.dtype(hidden_states.dtype).itemsize
    # bf16 packs 16 rows / sublane group, int8/fp8 32, f32 8.
    row_gran = max(8, 8 * (4 // x_itemsize))

    vmem_cap, dual_tc = _tpu_vmem_and_dualtc()
    if vmem_cap <= 64 * 1024 * 1024:          # v7x: leave headroom in 64 MiB
        vmem_limit = 52 * 1024 * 1024
    else:                                     # v5e / v6e: use most of 128 MiB
        vmem_limit = 100 * 1024 * 1024

    # Batch tile: full batch on single-TC parts; split to feed both v7x cores.
    if b_tile is None:
        if dual_tc and B >= 16 and B % 16 == 0:
            b_tile = B // 2
        else:
            b_tile = B
    elif B % b_tile != 0 or (b_tile != B and b_tile % 8 != 0):
        b_tile = B

    # x-stream budget = limit - single-buffered weights - acc - out - slack.
    w1_bytes = H * H2 * jnp.dtype(w1f.dtype).itemsize
    small_bytes = (2 * H2 + 1) * 4
    acc_bytes = b_tile * H * 4
    out_bytes = 2 * b_tile * _LANES * 4
    x_budget = vmem_limit - w1_bytes - small_bytes - acc_bytes - out_bytes - _SLACK_BYTES
    x_budget = max(x_budget, 2 * b_tile * row_gran * H * x_itemsize)

    if s_tile is None:
        s_tile = _pick_s_tile(S, b_tile, H, x_itemsize, x_budget, row_gran)
    s_tile = min(s_tile, S)
    if s_tile != S and s_tile % row_gran != 0:
        s_tile = max(row_gran, (s_tile // row_gran) * row_gran)

    grid = (pl.cdiv(B, b_tile), pl.cdiv(S, s_tile))

    x_bytes = B * S * H * x_itemsize
    cost = pl.CostEstimate(
        flops=int(B * S * H + 2 * B * H * H2 + 2 * B * H2),
        transcendentals=0,
        bytes_accessed=int(x_bytes + w1_bytes + small_bytes + B * _LANES * 4),
    )

    kernel = functools.partial(reward_kernel, seq_len=S, s_tile=s_tile)

    out = pl.pallas_call(
        kernel,
        out_shape=jax.ShapeDtypeStruct((B, _LANES), jnp.float32),
        grid=grid,
        in_specs=[
            # Streamed activations (double-buffered by default).
            pl.BlockSpec((b_tile, s_tile, H), lambda b, s: (b, s, 0)),
            # Constant-index-map weights: single VMEM buffer, DMA'd once.
            pl.BlockSpec((H, H2), lambda b, s: (0, 0),
                         pipeline_mode=pl.Buffered(1)),
            pl.BlockSpec((1, H2), lambda b, s: (0, 0),
                         pipeline_mode=pl.Buffered(1)),
            pl.BlockSpec((1, H2), lambda b, s: (0, 0),
                         pipeline_mode=pl.Buffered(1)),
            pl.BlockSpec((1, 1), lambda b, s: (0, 0),
                         pipeline_mode=pl.Buffered(1)),
        ],
        out_specs=pl.BlockSpec((b_tile, _LANES), lambda b, s: (b, 0)),
        scratch_shapes=[pltpu.VMEM((b_tile, H), jnp.float32)],
        compiler_params=pltpu.CompilerParams(
            dimension_semantics=("parallel", "arbitrary"),
            vmem_limit_bytes=int(vmem_limit),
        ),
        cost_estimate=cost,
    )(hidden_states, w1f, b1f, w2f, b2f)

    return out[:, 0]  # squeeze(-1) -> (B,)


# --------------------------------------------------------------------------- #
# Self-test
# --------------------------------------------------------------------------- #
if __name__ == "__main__":
    # Small shapes consistent with the module: (batch, seq, hidden).
    # S=192 with s_tile=128 exercises the multi-tile sequence accumulation and
    # the (last-tile-only) ragged masking path; the default-tiling call
    # exercises the full-S single-tile path.
    B, S, H = 8, 192, 256
    H2 = H // 2

    key = jax.random.PRNGKey(0)
    k_x, k_w1, k_b1, k_w2, k_b2 = jax.random.split(key, 5)

    hidden_states = jax.random.normal(k_x, (B, S, H),
                                      dtype=jnp.float32).astype(jnp.bfloat16)

    # nn.Linear(H, H//2) and nn.Linear(H//2, 1) params, stored as (in, out).
    w1 = jax.random.normal(k_w1, (H, H2), dtype=jnp.float32) * (1.0 / jnp.sqrt(H))
    b1 = jax.random.normal(k_b1, (H2,), dtype=jnp.float32) * 0.01
    w2 = jax.random.normal(k_w2, (H2, 1), dtype=jnp.float32) * (1.0 / jnp.sqrt(H2))
    b2 = jax.random.normal(k_b2, (1,), dtype=jnp.float32) * 0.01

    # One-time weight formatting (hoisted out of the forward path).
    params = prepare_reward_head_params(w1, b1, w2, b2)
    w1f, b1f, w2f, b2f = params

    rewards_ragged = qwen_reward_forward(hidden_states, params, s_tile=128)
    rewards_default = qwen_reward_forward(hidden_states, params)
    rewards_ragged, rewards_default = jax.block_until_ready(
        (rewards_ragged, rewards_default))

    # Pure-JAX reference with matching weight dtypes.
    pooled = hidden_states.astype(jnp.float32).mean(axis=1)
    h = jnp.dot(pooled.astype(w1f.dtype), w1f,
                preferred_element_type=jnp.float32) + b1f
    h = jnp.maximum(h, 0.0)
    ref = jnp.sum(h * w2f, axis=-1) + b2f[0, 0]

    assert rewards_ragged.shape == (B,)
    assert rewards_default.shape == (B,)
    assert jnp.allclose(rewards_ragged, ref, atol=2e-3, rtol=2e-2), (
        rewards_ragged, ref)
    assert jnp.allclose(rewards_default, ref, atol=2e-3, rtol=2e-2), (
        rewards_default, ref)

    print("KERNEL_OK")
</pallas_src>

<mosaic_0001>
module attributes {stable_mosaic.version = 11 : i64} {
  func.func @reward_kernel(%arg0: i32, %arg1: i32, %arg2: memref<8x128x256xbf16, #tpu.memory_space<vmem>>, %arg3: memref<256x128xf32, #tpu.memory_space<vmem>>, %arg4: memref<1x128xf32, #tpu.memory_space<vmem>>, %arg5: memref<1x128xf32, #tpu.memory_space<vmem>>, %arg6: memref<1x1xf32, #tpu.memory_space<vmem>>, %arg7: memref<8x128xf32, #tpu.memory_space<vmem>>, %arg8: memref<8x256xf32, #tpu.memory_space<vmem>>) attributes {dimension_semantics = [#tpu.dimension_semantics<parallel>, #tpu.dimension_semantics<arbitrary>], iteration_bounds = array<i64: 1, 2>, scalar_prefetch = 0 : i64, scratch_operands = 1 : i64, tpu.core_type = #tpu.core_type<tc>, window_params = [{transform_indices = @transform_0, window_bounds = array<i64: 8, 128, 256>}, {pipeline_mode = #tpu.pipeline_mode<synchronous>, transform_indices = @transform_1, window_bounds = array<i64: 256, 128>}, {pipeline_mode = #tpu.pipeline_mode<synchronous>, transform_indices = @transform_2, window_bounds = array<i64: 1, 128>}, {pipeline_mode = #tpu.pipeline_mode<synchronous>, transform_indices = @transform_3, window_bounds = array<i64: 1, 128>}, {pipeline_mode = #tpu.pipeline_mode<synchronous>, transform_indices = @transform_4, window_bounds = array<i64: 1, 1>}, {transform_indices = @transform_5, window_bounds = array<i64: 8, 128>}]} {
    %c0_i32 = arith.constant 0 : i32
    %0 = arith.cmpi eq, %arg1, %c0_i32 : i32
    %1 = arith.extui %0 : i1 to i32
    %c0_i32_0 = arith.constant 0 : i32
    %2 = arith.cmpi ne, %1, %c0_i32_0 : i32
    scf.if %2 {
      %cst = arith.constant 0.000000e+00 : f32
      %12 = vector.broadcast %cst : f32 to vector<8x256xf32>
      %c0 = arith.constant 0 : index
      %c0_6 = arith.constant 0 : index
      %13 = vector.load %arg8[%c0, %c0_6] : memref<8x256xf32, #tpu.memory_space<vmem>>, vector<8x256xf32>
      tpu.vector_store %arg8[%c0, %c0_6], %12 {strides = array<i32>} : memref<8x256xf32, #tpu.memory_space<vmem>>, vector<8x256xf32>,
    } else {
    }
    %c1_i32 = arith.constant 1 : i32
    %3 = arith.cmpi ne, %arg1, %c1_i32 : i32
    %4 = arith.extui %3 : i1 to i32
    %c0_i32_1 = arith.constant 0 : i32
    %5 = arith.cmpi ne, %4, %c0_i32_1 : i32
    scf.if %5 {
      %c0 = arith.constant 0 : index
      %c0_6 = arith.constant 0 : index
      %12 = vector.load %arg8[%c0, %c0_6] : memref<8x256xf32, #tpu.memory_space<vmem>>, vector<8x256xf32>
      %c0_7 = arith.constant 0 : index
      %c0_8 = arith.constant 0 : index
      %c0_9 = arith.constant 0 : index
      %13 = vector.load %arg2[%c0_7, %c0_8, %c0_9] : memref<8x128x256xbf16, #tpu.memory_space<vmem>>, vector<8x128x256xbf16>
      %14 = arith.extf %13 : vector<8x128x256xbf16> to vector<8x128x256xf32>
      %cst = arith.constant dense<0.000000e+00> : vector<8x256xf32>
      %15 = vector.multi_reduction <add>, %14, %cst [1] : vector<8x128x256xf32> to vector<8x256xf32>
      %16 = arith.addf %12, %15 : vector<8x256xf32>
      %c0_10 = arith.constant 0 : index
      %c0_11 = arith.constant 0 : index
      %17 = vector.load %arg8[%c0_10, %c0_11] : memref<8x256xf32, #tpu.memory_space<vmem>>, vector<8x256xf32>
      tpu.vector_store %arg8[%c0_10, %c0_11], %16 {strides = array<i32>} : memref<8x256xf32, #tpu.memory_space<vmem>>, vector<8x256xf32>,
    } else {
    }
    %c1_i32_2 = arith.constant 1 : i32
    %6 = arith.cmpi eq, %arg1, %c1_i32_2 : i32
    %7 = arith.extui %6 : i1 to i32
    %c0_i32_3 = arith.constant 0 : i32
    %8 = arith.cmpi ne, %7, %c0_i32_3 : i32
    scf.if %8 {
      %c0 = arith.constant 0 : index
      %c0_6 = arith.constant 0 : index
      %c0_7 = arith.constant 0 : index
      %12 = vector.load %arg2[%c0, %c0_6, %c0_7] : memref<8x128x256xbf16, #tpu.memory_space<vmem>>, vector<8x128x256xbf16>
      %13 = arith.extf %12 : vector<8x128x256xbf16> to vector<8x128x256xf32>
      %c128_i32 = arith.constant 128 : i32
      %14 = arith.muli %arg1, %c128_i32 : i32
      %15 = tpu.iota {dimensions = array<i32: 1>} : vector<1x128x1xi32>
      %16 = vector.broadcast %14 : i32 to vector<1x128x1xi32>
      %17 = arith.addi %16, %15 : vector<1x128x1xi32>
      %c192_i32 = arith.constant 192 : i32
      %18 = vector.broadcast %c192_i32 : i32 to vector<1x128x1xi32>
      %19 = arith.cmpi slt, %17, %18 : vector<1x128x1xi32>
      %cst = arith.constant 0.000000e+00 : f32
      %20 = vector.shape_cast %19 : vector<1x128x1xi1> to vector<1x128x1xi1>
      %21 = vector.broadcast %20 : vector<1x128x1xi1> to vector<8x128x256xi1>
      %22 = vector.broadcast %cst : f32 to vector<8x128x256xf32>
      %23 = arith.select %21, %13, %22 : vector<8x128x256xi1>, vector<8x128x256xf32>
      %c0_8 = arith.constant 0 : index
      %c0_9 = arith.constant 0 : index
      %24 = vector.load %arg8[%c0_8, %c0_9] : memref<8x256xf32, #tpu.memory_space<vmem>>, vector<8x256xf32>
      %cst_10 = arith.constant dense<0.000000e+00> : vector<8x256xf32>
      %25 = vector.multi_reduction <add>, %23, %cst_10 [1] : vector<8x128x256xf32> to vector<8x256xf32>
      %26 = arith.addf %24, %25 : vector<8x256xf32>
      %c0_11 = arith.constant 0 : index
      %c0_12 = arith.constant 0 : index
      %27 = vector.load %arg8[%c0_11, %c0_12] : memref<8x256xf32, #tpu.memory_space<vmem>>, vector<8x256xf32>
      tpu.vector_store %arg8[%c0_11, %c0_12], %26 {strides = array<i32>} : memref<8x256xf32, #tpu.memory_space<vmem>>, vector<8x256xf32>,
    } else {
    }
    %c1_i32_4 = arith.constant 1 : i32
    %9 = arith.cmpi eq, %arg1, %c1_i32_4 : i32
    %10 = arith.extui %9 : i1 to i32
    %c0_i32_5 = arith.constant 0 : i32
    %11 = arith.cmpi ne, %10, %c0_i32_5 : i32
    scf.if %11 {
      %c0 = arith.constant 0 : index
      %c0_6 = arith.constant 0 : index
      %12 = vector.load %arg8[%c0, %c0_6] : memref<8x256xf32, #tpu.memory_space<vmem>>, vector<8x256xf32>
      %cst = arith.constant 0.00520833349 : f32
      %13 = vector.broadcast %cst : f32 to vector<8x256xf32>
      %14 = arith.mulf %12, %13 : vector<8x256xf32>
      %c0_7 = arith.constant 0 : index
      %c0_8 = arith.constant 0 : index
      %15 = vector.load %arg3[%c0_7, %c0_8] : memref<256x128xf32, #tpu.memory_space<vmem>>, vector<256x128xf32>
      %cst_9 = arith.constant dense<0.000000e+00> : vector<8x128xf32>
      %16 = tpu.matmul %14, %15, %cst_9 {dimension_numbers = #tpu.dot_dimension_numbers<[1], [0], [0], [1], [0, 0, 1, 1], [], []>} : vector<8x256xf32>, vector<256x128xf32>, vector<8x128xf32> -> vector<8x128xf32>
      %c0_10 = arith.constant 0 : index
      %c0_11 = arith.constant 0 : index
      %17 = vector.load %arg4[%c0_10, %c0_11] : memref<1x128xf32, #tpu.memory_space<vmem>>, vector<1x128xf32>
      %18 = vector.broadcast %17 : vector<1x128xf32> to vector<8x128xf32>
      %19 = arith.addf %16, %18 : vector<8x128xf32>
      %cst_12 = arith.constant 0.000000e+00 : f32
      %20 = vector.broadcast %cst_12 : f32 to vector<8x128xf32>
      %21 = arith.maximumf %19, %20 : vector<8x128xf32>
      %c0_13 = arith.constant 0 : index
      %c0_14 = arith.constant 0 : index
      %22 = vector.load %arg5[%c0_13, %c0_14] : memref<1x128xf32, #tpu.memory_space<vmem>>, vector<1x128xf32>
      %23 = vector.broadcast %22 : vector<1x128xf32> to vector<8x128xf32>
      %24 = arith.mulf %21, %23 : vector<8x128xf32>
      %cst_15 = arith.constant dense<0.000000e+00> : vector<8xf32>
      %25 = vector.multi_reduction <add>, %24, %cst_15 [1] : vector<8x128xf32> to vector<8xf32>
      %26 = vector.shape_cast %25 : vector<8xf32> to vector<8x1xf32>
      %c0_16 = arith.constant 0 : index
      %c0_17 = arith.constant 0 : index
      %27 = vector.load %arg6[%c0_16, %c0_17] : memref<1x1xf32, #tpu.memory_space<vmem>>, vector<1x1xf32>
      %28 = vector.broadcast %27 : vector<1x1xf32> to vector<8x1xf32>
      %29 = arith.addf %26, %28 : vector<8x1xf32>
      %30 = vector.shape_cast %29 : vector<8x1xf32> to vector<8x1xf32>
      %31 = vector.broadcast %30 : vector<8x1xf32> to vector<8x128xf32>
      %c0_18 = arith.constant 0 : index
      %c0_19 = arith.constant 0 : index
      %32 = vector.load %arg7[%c0_18, %c0_19] : memref<8x128xf32, #tpu.memory_space<vmem>>, vector<8x128xf32>
      tpu.vector_store %arg7[%c0_18, %c0_19], %31 {strides = array<i32>} : memref<8x128xf32, #tpu.memory_space<vmem>>, vector<8x128xf32>,
    } else {
    }
    return
  }
  func.func @transform_0(%arg0: i32, %arg1: i32) -> (i32, i32, i32) {
    %c0_i32 = arith.constant 0 : i32
    %c0_i32_0 = arith.constant 0 : i32
    return %arg0, %arg1, %c0_i32 : i32, i32, i32
  }
  func.func @transform_1(%arg0: i32, %arg1: i32) -> (i32, i32) {
    %c0_i32 = arith.constant 0 : i32
    %c0_i32_0 = arith.constant 0 : i32
    %c0_i32_1 = arith.constant 0 : i32
    return %c0_i32, %c0_i32_0 : i32, i32
  }
  func.func @transform_2(%arg0: i32, %arg1: i32) -> (i32, i32) {
    %c0_i32 = arith.constant 0 : i32
    %c0_i32_0 = arith.constant 0 : i32
    %c0_i32_1 = arith.constant 0 : i32
    return %c0_i32, %c0_i32_0 : i32, i32
  }
  func.func @transform_3(%arg0: i32, %arg1: i32) -> (i32, i32) {
    %c0_i32 = arith.constant 0 : i32
    %c0_i32_0 = arith.constant 0 : i32
    %c0_i32_1 = arith.constant 0 : i32
    return %c0_i32, %c0_i32_0 : i32, i32
  }
  func.func @transform_4(%arg0: i32, %arg1: i32) -> (i32, i32) {
    %c0_i32 = arith.constant 0 : i32
    %c0_i32_0 = arith.constant 0 : i32
    %c0_i32_1 = arith.constant 0 : i32
    return %c0_i32, %c0_i32_0 : i32, i32
  }
  func.func @transform_5(%arg0: i32, %arg1: i32) -> (i32, i32) {
    %c0_i32 = arith.constant 0 : i32
    %c0_i32_0 = arith.constant 0 : i32
    return %arg0, %c0_i32 : i32, i32
  }
}

</mosaic_0001>

<llo_original>
// kernel: tpu_custom_call.1
$region0: #{tpu_custom_call.1}
  #allocation0 [shape = 'u32[]', space=smem, size = 0x4, offset = 0x4, fixed_abs, tag = 'smem constant byte address 0x4 - core index']
  #allocation1 [shape = 'u32[72,128]{1,0:T(1,128)}', space=vmem, size = 0x9000, scoped, tag = 'internal scratch']
  #allocation2 [shape = 'f32[8,256]{1,0:T(8,128)}', space=vmem, size = 0x2000, scoped, tag = 'scratch operand']
  #allocation3 [shape = 'f32[1,1]{1,0:T(1,128)S(1)}', space=vmem, size = 0x200, scoped, tag = 'scoped memory for tpu_custom_call.1']
  #allocation10 [shape = 's32[]', space=sflag, size = 0x4, offset = 0, fixed_abs, tag = 'sflag constant byte address 0x0 - dummy sync flag']
  %s0 = inlined_call_operand.hbm [shape: bf16[8,192,256], index: 0, kind: input, shape index: {}]
  %s1 = inlined_call_operand.hbm [shape: f32[256,128], index: 1, kind: input, shape index: {}]
  %s2 = inlined_call_operand.vmem [shape: f32[1,128], index: 2, kind: input, shape index: {}]
  %s3 = inlined_call_operand.vmem [shape: f32[1,128], index: 3, kind: input, shape index: {}]
  %s4 = inlined_call_operand.<no memory space> [shape: f32[1,1], index: 4, kind: input, shape index: {}]
  %s5 = inlined_call_operand.hbm [shape: f32[8,128], index: 5, kind: output, shape index: {}]
  %s6 = sld [smem:[#allocation0]]
  $region73: #{tpu_custom_call.1} parent=0
    _
  %s8 = ssub.s32 1, %s6
  %s9 = scalar_select 0, %s8, %s6
  %v10 = vstv %s4
  %11 = vst [vmem:[#allocation3] sm:$0x1] %v10
  $region1: #{tpu_custom_call.1} parent=0
    #allocation4 [shape = 'u8[1048576]{0}', space=vmem, size = 0x100000, scoped, tag = 'input window, operand 0']
    #allocation5 [shape = 's32[2]{0}', space=sflag, size = 0x8, scoped, tag = 'scoped memory for tpu_custom_call.1']
    #allocation6 [shape = 's32[2]{0}', space=sflag, size = 0x8, scoped, tag = 'scoped memory for tpu_custom_call.1']
    #allocation7 [shape = 'u8[131072]{0}', space=vmem, size = 0x20000, scoped, tag = 'input window, operand 1, single buffered']
    #allocation8 [shape = 's32[1]{0}', space=sflag, size = 0x4, scoped, tag = 'scoped memory for tpu_custom_call.1']
    #allocation9 [shape = 'u8[4096]{0}', space=vmem, size = 0x1000, scoped, tag = 'output window, operand 0, single buffered']
    %12 = vsyncpa [#allocation5], 0
    %s13 = scalar_lea.sflag [#allocation5], 1
    %14 = vsyncpa %s13, 0
    %15 = vsyncpa [#allocation8], 0
    %16 = vsyncpa [#allocation6], 0
    loop: start=0, step=1, limit=4
    $region2: #{tpu_custom_call.1} parent=1 // loop_pre_header
      _
    $region3: #{tpu_custom_call.1} parent=1 // loop_header
      %s18 = sphi 0, %s22
      %p19 = scmp.ge.s32.totalorder %s18, 4
      %s25 = sphi 0, %s37
      %s26 = sphi 0, %s33
      %s27 = sphi 0, %s25
      %s28 = sphi 0, %s26
      %s29 = sphi 0, %s27
      %s30 = sphi 0, %s28
      %s42 = sphi 0, %s44
      %s45 = sphi 0, %s42
      %s46 = sphi 0, %s45
      %s62 = sphi 0, %s46
      %s66 = sphi 0, %s66
      %s68 = sphi 0, %s66
      %s69 = sphi 0, %s68
      %s83 = sphi 0, %s69
      %s87 = sphi 0, %s87
      %s89 = sphi 0, %s87
      %s90 = sphi 0, %s89
      %s104 = sphi 0, %s90
      %s108 = sphi 0, %s108
      %s110 = sphi 0, %s108
      %s111 = sphi 0, %s110
      %s125 = sphi 0, %s111
      %s129 = sphi 0, %s129
      %s131 = sphi 0, %s129
      %s132 = sphi 0, %s131
      %s146 = sphi 0, %s132
      %s152 = sphi 0, %s154
      %s155 = sphi 0, %s152
      %s156 = sphi 0, %s155
      %s172 = sphi 0, %s156
    $region4: #{tpu_custom_call.1} parent=1 // loop_header_branch
      %21 = sbr.rel (%p19) target = $region8
    $region5: #{tpu_custom_call.1} parent=1 // loop_body
      %s23 = ssub.s32 %s18, 1
      %s24 = ssub.s32 %s18, 2
      %s31 = sadd.s32 1, %s26
      %p32 = scmp.ge.s32.totalorder %s31, 2
      %s33 = scalar_select %p32, 0, %s31
      %s34 = sadd.s32 1, %s25
      %s35 = scalar_select %p32, %s34, %s25
      %p36 = scmp.ge.s32.totalorder %s35, 1
      %s37 = scalar_select %p36, 0, %s35
      %s38 = ssub.s32 %s25, %s37
      %s39 = ssub.s32 %s26, %s33
      %s40 = sor.u32 %s38, %s39
      %p41 = scmp.eq.s32.totalorder %s40, 0
      %s43 = sadd.s32 %s42, 1
      %s44 = scalar_select %p41, %s42, %s43
      %p47 = pneg %p41
      %p48 = scmp.eq.s32.totalorder %s18, 1
      %p49 = por %p47, %p48
      %p50 = scmp.ne.s32.totalorder %s42, %s45
      %p51 = scmp.eq.s32.totalorder %s18, 0
      %p52 = por %p50, %p51
      %p53 = scmp.ne.s32.totalorder %s42, %s45
      %p54 = scmp.eq.s32.totalorder %s23, 1
      %p55 = por %p53, %p54
      %p56 = scmp.ne.s32.totalorder %s45, %s46
      %p57 = scmp.eq.s32.totalorder %s23, 0
      %p58 = por %p56, %p57
      %p59 = scmp.ne.s32.totalorder %s45, %s46
      %p60 = scmp.eq.s32.totalorder %s24, 1
      %p61 = por %p59, %p60
      %p63 = scmp.ne.s32.totalorder %s46, %s62
      %p64 = scmp.eq.s32.totalorder %s24, 0
      %p65 = por %p63, %p64
      %s67 = sadd.s32 %s66, 1
      %p70 = scmp.eq.s32.totalorder %s18, 1
      %p71 = scmp.ne.s32.totalorder %s66, %s68
      %p72 = scmp.eq.s32.totalorder %s18, 0
      %p73 = por %p71, %p72
      %p74 = scmp.ne.s32.totalorder %s66, %s68
      %p75 = scmp.eq.s32.totalorder %s23, 1
      %p76 = por %p74, %p75
      %p77 = scmp.ne.s32.totalorder %s68, %s69
      %p78 = scmp.eq.s32.totalorder %s23, 0
      %p79 = por %p77, %p78
      %p80 = scmp.ne.s32.totalorder %s68, %s69
      %p81 = scmp.eq.s32.totalorder %s24, 1
      %p82 = por %p80, %p81
      %p84 = scmp.ne.s32.totalorder %s69, %s83
      %p85 = scmp.eq.s32.totalorder %s24, 0
      %p86 = por %p84, %p85
      %s88 = sadd.s32 %s87, 1
      %p91 = scmp.eq.s32.totalorder %s18, 1
      %p92 = scmp.ne.s32.totalorder %s87, %s89
      %p93 = scmp.eq.s32.totalorder %s18, 0
      %p94 = por %p92, %p93
      %p95 = scmp.ne.s32.totalorder %s87, %s89
      %p96 = scmp.eq.s32.totalorder %s23, 1
      %p97 = por %p95, %p96
      %p98 = scmp.ne.s32.totalorder %s89, %s90
      %p99 = scmp.eq.s32.totalorder %s23, 0
      %p100 = por %p98, %p99
      %p101 = scmp.ne.s32.totalorder %s89, %s90
      %p102 = scmp.eq.s32.totalorder %s24, 1
      %p103 = por %p101, %p102
      %p105 = scmp.ne.s32.totalorder %s90, %s104
      %p106 = scmp.eq.s32.totalorder %s24, 0
      %p107 = por %p105, %p106
      %s109 = sadd.s32 %s108, 1
      %p112 = scmp.eq.s32.totalorder %s18, 1
      %p113 = scmp.ne.s32.totalorder %s108, %s110
      %p114 = scmp.eq.s32.totalorder %s18, 0
      %p115 = por %p113, %p114
      %p116 = scmp.ne.s32.totalorder %s108, %s110
      %p117 = scmp.eq.s32.totalorder %s23, 1
      %p118 = por %p116, %p117
      %p119 = scmp.ne.s32.totalorder %s110, %s111
      %p120 = scmp.eq.s32.totalorder %s23, 0
      %p121 = por %p119, %p120
      %p122 = scmp.ne.s32.totalorder %s110, %s111
      %p123 = scmp.eq.s32.totalorder %s24, 1
      %p124 = por %p122, %p123
      %p126 = scmp.ne.s32.totalorder %s111, %s125
      %p127 = scmp.eq.s32.totalorder %s24, 0
      %p128 = por %p126, %p127
      %s130 = sadd.s32 %s129, 1
      %p133 = scmp.eq.s32.totalorder %s18, 1
      %p134 = scmp.ne.s32.totalorder %s129, %s131
      %p135 = scmp.eq.s32.totalorder %s18, 0
      %p136 = por %p134, %p135
      %p137 = scmp.ne.s32.totalorder %s129, %s131
      %p138 = scmp.eq.s32.totalorder %s23, 1
      %p139 = por %p137, %p138
      %p140 = scmp.ne.s32.totalorder %s131, %s132
      %p141 = scmp.eq.s32.totalorder %s23, 0
      %p142 = por %p140, %p141
      %p143 = scmp.ne.s32.totalorder %s131, %s132
      %p144 = scmp.eq.s32.totalorder %s24, 1
      %p145 = por %p143, %p144
      %p147 = scmp.ne.s32.totalorder %s132, %s146
      %p148 = scmp.eq.s32.totalorder %s24, 0
      %p149 = por %p147, %p148
      %s150 = ssub.s32 %s25, %s37
      %p151 = scmp.eq.s32.totalorder %s150, 0
      %s153 = sadd.s32 %s152, 1
      %s154 = scalar_select %p151, %s152, %s153
      %p157 = pneg %p151
      %p158 = scmp.eq.s32.totalorder %s18, 1
      %p159 = por %p157, %p158
      %p160 = scmp.ne.s32.totalorder %s152, %s155
      %p161 = scmp.eq.s32.totalorder %s18, 0
      %p162 = por %p160, %p161
      %p163 = scmp.ne.s32.totalorder %s152, %s155
      %p164 = scmp.eq.s32.totalorder %s23, 1
      %p165 = por %p163, %p164
      %p166 = scmp.ne.s32.totalorder %s155, %s156
      %p167 = scmp.eq.s32.totalorder %s23, 0
      %p168 = por %p166, %p167
      %p169 = scmp.ne.s32.totalorder %s155, %s156
      %p170 = scmp.eq.s32.totalorder %s24, 1
      %p171 = por %p169, %p170
      %p173 = scmp.ne.s32.totalorder %s156, %s172
      %p174 = scmp.eq.s32.totalorder %s24, 0
      %p175 = por %p173, %p174
      %p176 = scmp.le.s32.totalorder 1, %s18
      %p177 = scmp.lt.s32.totalorder %s18, 3
      %p178 = pnand %p176, %p177
      %p179 = pneg %p178
      // Predicated region
      $region9: #{tpu_custom_call.1} parent=5 // pred_check
        _
      $region10: #{tpu_custom_call.1} parent=5 // pred_check_branch
        %181 = sbr.rel (%p178) target = $region12
      $region11: #{tpu_custom_call.1} parent=5 // pred_region
        %s182 = ssub.s32 %s18, 1
        // Predicated region
        $region13: #{tpu_custom_call.1} parent=11 // pred_check
          %p183 = pneg %p79
        $region14: #{tpu_custom_call.1} parent=11 // pred_check_branch
          %185 = sbr.rel (%p183) target = $region16
        $region15: #{tpu_custom_call.1} parent=11 // pred_region
          %187 = vsyncadd [#allocation8], 0
          %s188 = sshll.u32 %s1, 4
          %s189 = int_to_ptr.hbm [resolvable:$true] %s188
          %s190 = sshll.u32 [#allocation7], 4
          %s191 = int_to_ptr.vmem [resolvable:$true] %s190
          %196 = dma.hbm_to_vmem [thread:$0]  %s189, 4096, %s191, [#allocation8], 128, 128, 8
        $region16: #{tpu_custom_call.1} parent=11 // pred_fallthru
          _
        // Predicated region
        $region17: #{tpu_custom_call.1} parent=11 // pred_check
          %p197 = pneg %p100
        $region18: #{tpu_custom_call.1} parent=11 // pred_check_branch
          %199 = sbr.rel (%p197) target = $region20
        $region19: #{tpu_custom_call.1} parent=11 // pred_region
          _
        $region20: #{tpu_custom_call.1} parent=11 // pred_fallthru
          _
        // Predicated region
        $region21: #{tpu_custom_call.1} parent=11 // pred_check
          %p200 = pneg %p121
        $region22: #{tpu_custom_call.1} parent=11 // pred_check_branch
          %202 = sbr.rel (%p200) target = $region24
        $region23: #{tpu_custom_call.1} parent=11 // pred_region
          _
        $region24: #{tpu_custom_call.1} parent=11 // pred_fallthru
          _
        // Predicated region
        $region25: #{tpu_custom_call.1} parent=11 // pred_check
          %p203 = pneg %p142
        $region26: #{tpu_custom_call.1} parent=11 // pred_check_branch
          %205 = sbr.rel (%p203) target = $region28
        $region27: #{tpu_custom_call.1} parent=11 // pred_region
          _
        $region28: #{tpu_custom_call.1} parent=11 // pred_fallthru
          _
      $region12: #{tpu_custom_call.1} parent=5 // pred_fallthru
        _
      %p206 = scmp.lt.s32.totalorder %s18, 2
      // Predicated region
      $region29: #{tpu_custom_call.1} parent=5 // pred_check
        %p207 = pneg %p206
      $region30: #{tpu_custom_call.1} parent=5 // pred_check_branch
        %209 = sbr.rel (%p207) target = $region32
      $region31: #{tpu_custom_call.1} parent=5 // pred_region
        // Predicated region
        $region33: #{tpu_custom_call.1} parent=31 // pred_check
          %p210 = pneg %p52
        $region34: #{tpu_custom_call.1} parent=31 // pred_check_branch
          %212 = sbr.rel (%p210) target = $region36
        $region35: #{tpu_custom_call.1} parent=31 // pred_region
          #allocation11 [shape = 'u32[6]{0}', space=smem, size = 0x18, scoped, tag = 'DMA stride descriptor']
          %s213 = sand.u32 %s42, 1
          %s214 = scalar_lea.sflag [#allocation5], %s213
          %s215 = sand.u32 %s42, 1
          %s216 = smul.addr %s215, 1024
          %s217 = scalar_lea.vmem [#allocation4], %s216
          %s218 = smul.u32 8, %s25
          %s219 = smul.u32 16, %s26
          %s220 = ssub.s32 24, %s219
          %p221 = scmp.lt.s32.totalorder %s220, 16
          %s222 = scalar_select %p221, %s220, 16
          %s223 = smul.u32 32, %s222
          %s224 = smul.u32 %s223, 2
          %s225 = ssub.s32 1024, %s224
          %s226 = sshll.u32 %s225, 4
          %227 = vsyncadd %s214, %s226
          %p228 = scmp.ne.s32.totalorder 0, %s224
          %s229 = smul.addr %s219, 2
          %s230 = smul.addr %s218, 48
          %s231 = sadd.s32 %s229, %s230
          %s232 = smul.addr %s231, 4
          %s233 = scalar_lea.hbm %s0, %s232
          %s234 = smul.u32 8, %s222
          %s235 = smul.u32 %s234, 8
          %s237 = sshll.u32 1, 14
          %s238 = sxor.u32 4294967295, %s237
          %s240 = sld [smem:[#allocation0]]
          %s241 = sadd.s32 2, %s240
          %s243 = sshll.u32 7, 26
          %s244 = sxor.u32 4294967295, %s243
          %s245 = sand.u32 0, %s244
          %s246 = sshll.u32 %s241, 26
          %s247 = sor.u32 %s245, %s246
          %s248 = sshll.u32 %s233, 4
          %s249 = int_to_ptr.hbm [resolvable:$true] %s248
          %s250 = sshll.u32 %s217, 4
          %s251 = int_to_ptr.vmem [resolvable:$true] %s250
          %s252 = sshll.u32 %s235, 4
          %257 = sst [smem:[#allocation11]] 3072
          %s258 = scalar_lea.smem [#allocation11], 1
          %259 = sst [smem:[%s258]] 2048
          %s260 = scalar_lea.smem [#allocation11], 2
          %261 = sst [smem:[%s260]] %s222
          %s262 = scalar_lea.smem [#allocation11], 3
          %263 = sst [smem:[%s262]] 128
          %s264 = scalar_lea.smem [#allocation11], 4
          %265 = sst [smem:[%s264]] 128
          %s266 = scalar_lea.smem [#allocation11], 5
          %267 = sst [smem:[%s266]] 8
          %269 = dma.general (%p228), %s249, %s252, %s251, %s214, [#allocation10], [#allocation11], %s247, 0
        $region36: #{tpu_custom_call.1} parent=31 // pred_fallthru
          _
      $region32: #{tpu_custom_call.1} parent=5 // pred_fallthru
        _
      %p270 = scmp.le.s32.totalorder 1, %s18
      %p271 = scmp.lt.s32.totalorder %s18, 3
      %p272 = pnand %p270, %p271
      %p273 = pneg %p272
      // Predicated region
      $region37: #{tpu_custom_call.1} parent=5 // pred_check
        _
      $region38: #{tpu_custom_call.1} parent=5 // pred_check_branch
        %275 = sbr.rel (%p272) target = $region40
      $region39: #{tpu_custom_call.1} parent=5 // pred_region
        %s276 = ssub.s32 %s18, 1
        %s277 = sand.u32 %s45, 1
        %s278 = scalar_lea.sflag [#allocation5], %s277
        %s279 = sand.u32 %s45, 1
        %s280 = smul.addr %s279, 1024
        %s281 = scalar_lea.vmem [#allocation4], %s280
        // Predicated region
        $region41: #{tpu_custom_call.1} parent=39 // pred_check
          %p282 = pneg %p58
        $region42: #{tpu_custom_call.1} parent=39 // pred_check_branch
          %284 = sbr.rel (%p282) target = $region44
        $region43: #{tpu_custom_call.1} parent=39 // pred_region
          %286 = dma.done %s278, 16384
        $region44: #{tpu_custom_call.1} parent=39 // pred_fallthru
          _
        // Predicated region
        $region45: #{tpu_custom_call.1} parent=39 // pred_check
          %p287 = pneg %p79
        $region46: #{tpu_custom_call.1} parent=39 // pred_check_branch
          %289 = sbr.rel (%p287) target = $region48
        $region47: #{tpu_custom_call.1} parent=39 // pred_region
          %291 = dma.done [#allocation8], 4096
        $region48: #{tpu_custom_call.1} parent=39 // pred_fallthru
          _
        %s292 = sand.u32 %s45, 1
        %s293 = scalar_lea.sflag [#allocation5], %s292
        %s294 = sand.u32 %s45, 1
        %s295 = smul.addr %s294, 1024
        %s296 = scalar_lea.vmem [#allocation4], %s295
        %p297 = pneg %p58
        %p298 = pneg %p55
        %p299 = pneg %p79
        %p300 = pneg %p76
        %p301 = pneg %p100
        %p302 = pneg %p97
        %p303 = pneg %p121
        %p304 = pneg %p118
        %p305 = pneg %p142
        %p306 = pneg %p139
        %p307 = pneg %p168
        %p308 = pneg %p165
        %s309 = smul.u32 8, %s27
        %s310 = smul.u32 16, %s28
        %s311 = ssub.s32 24, %s310
        %p312 = scmp.lt.s32.totalorder %s311, 16
        %s313 = scalar_select %p312, %s311, 16
        %s314 = smul.u32 32, %s313
        %s315 = smul.u32 %s314, 2
        %p316 = scmp.eq.s32.totalorder %s28, 0
        // Predicated region
        $region49: #{tpu_custom_call.1} parent=39 // pred_check
          %p317 = pneg %p316
        $region50: #{tpu_custom_call.1} parent=39 // pred_check_branch
          %319 = sbr.rel (%p317) target = $region52
        $region51: #{tpu_custom_call.1} parent=39 // pred_region
          %320 = vst [vmem:[#allocation2] sm:$0xff] 0.0
          %321 = vst [vmem:[#allocation2 + $0x8] sm:$0xff] 0.0
        $region52: #{tpu_custom_call.1} parent=39 // pred_fallthru
          _
        %p322 = scmp.ne.s32.totalorder %s28, 1
        // Predicated region
        $region53: #{tpu_custom_call.1} parent=39 // pred_check
          %p323 = pneg %p322
        $region54: #{tpu_custom_call.1} parent=39 // pred_check_branch
          %325 = sbr.rel (%p323) target = $region56
        $region55: #{tpu_custom_call.1} parent=39 // pred_region
          %v326 = vld [vmem:[#allocation2] sm:$0xff]
          %v327 = vld [vmem:[#allocation2 + $0x8] sm:$0xff]
          %v328 = vld [vmem:[%s281] sm:$0xff]
          %v329 = vld [vmem:[%s281 + $0x8] sm:$0xff]
          %v330 = vld [vmem:[%s281 + $0x10] sm:$0xff]
          %v331 = vld [vmem:[%s281 + $0x18] sm:$0xff]
          %v332 = vld [vmem:[%s281 + $0x20] sm:$0xff]
          %v333 = vld [vmem:[%s281 + $0x28] sm:$0xff]
          %v334 = vld [vmem:[%s281 + $0x30] sm:$0xff]
          %v335 = vld [vmem:[%s281 + $0x38] sm:$0xff]
          %v336 = vld [vmem:[%s281 + $0x40] sm:$0xff]
          %v337 = vld [vmem:[%s281 + $0x48] sm:$0xff]
          %v338 = vld [vmem:[%s281 + $0x50] sm:$0xff]
          %v339 = vld [vmem:[%s281 + $0x58] sm:$0xff]
          %v340 = vld [vmem:[%s281 + $0x60] sm:$0xff]
          %v341 = vld [vmem:[%s281 + $0x68] sm:$0xff]
          %v342 = vld [vmem:[%s281 + $0x70] sm:$0xff]
          %v343 = vld [vmem:[%s281 + $0x78] sm:$0xff]
          %v344 = vld [vmem:[%s281 + $0x80] sm:$0xff]
          %v345 = vld [vmem:[%s281 + $0x88] sm:$0xff]
          %v346 = vld [vmem:[%s281 + $0x90] sm:$0xff]
          %v347 = vld [vmem:[%s281 + $0x98] sm:$0xff]
          %v348 = vld [vmem:[%s281 + $0xa0] sm:$0xff]
          %v349 = vld [vmem:[%s281 + $0xa8] sm:$0xff]
          %v350 = vld [vmem:[%s281 + $0xb0] sm:$0xff]
          %v351 = vld [vmem:[%s281 + $0xb8] sm:$0xff]
          %v352 = vld [vmem:[%s281 + $0xc0] sm:$0xff]
          %v353 = vld [vmem:[%s281 + $0xc8] sm:$0xff]
          %v354 = vld [vmem:[%s281 + $0xd0] sm:$0xff]
          %v355 = vld [vmem:[%s281 + $0xd8] sm:$0xff]
          %v356 = vld [vmem:[%s281 + $0xe0] sm:$0xff]
          %v357 = vld [vmem:[%s281 + $0xe8] sm:$0xff]
          %v358 = vld [vmem:[%s281 + $0xf0] sm:$0xff]
          %v359 = vld [vmem:[%s281 + $0xf8] sm:$0xff]
          %v360 = vld [vmem:[%s281 + $0x100] sm:$0xff]
          %v361 = vld [vmem:[%s281 + $0x108] sm:$0xff]
          %v362 = vld [vmem:[%s281 + $0x110] sm:$0xff]
          %v363 = vld [vmem:[%s281 + $0x118] sm:$0xff]
          %v364 = vld [vmem:[%s281 + $0x120] sm:$0xff]
          %v365 = vld [vmem:[%s281 + $0x128] sm:$0xff]
          %v366 = vld [vmem:[%s281 + $0x130] sm:$0xff]
          %v367 = vld [vmem:[%s281 + $0x138] sm:$0xff]
          %v368 = vld [vmem:[%s281 + $0x140] sm:$0xff]
          %v369 = vld [vmem:[%s281 + $0x148] sm:$0xff]
          %v370 = vld [vmem:[%s281 + $0x150] sm:$0xff]
          %v371 = vld [vmem:[%s281 + $0x158] sm:$0xff]
          %v372 = vld [vmem:[%s281 + $0x160] sm:$0xff]
          %v373 = vld [vmem:[%s281 + $0x168] sm:$0xff]
          %v374 = vld [vmem:[%s281 + $0x170] sm:$0xff]
          %v375 = vld [vmem:[%s281 + $0x178] sm:$0xff]
          %v376 = vld [vmem:[%s281 + $0x180] sm:$0xff]
          %v377 = vld [vmem:[%s281 + $0x188] sm:$0xff]
          %v378 = vld [vmem:[%s281 + $0x190] sm:$0xff]
          %v379 = vld [vmem:[%s281 + $0x198] sm:$0xff]
          %v380 = vld [vmem:[%s281 + $0x1a0] sm:$0xff]
          %v381 = vld [vmem:[%s281 + $0x1a8] sm:$0xff]
          %v382 = vld [vmem:[%s281 + $0x1b0] sm:$0xff]
          %v383 = vld [vmem:[%s281 + $0x1b8] sm:$0xff]
          %v384 = vld [vmem:[%s281 + $0x1c0] sm:$0xff]
          %v385 = vld [vmem:[%s281 + $0x1c8] sm:$0xff]
          %v386 = vld [vmem:[%s281 + $0x1d0] sm:$0xff]
          %v387 = vld [vmem:[%s281 + $0x1d8] sm:$0xff]
          %v388 = vld [vmem:[%s281 + $0x1e0] sm:$0xff]
          %v389 = vld [vmem:[%s281 + $0x1e8] sm:$0xff]
          %v390 = vld [vmem:[%s281 + $0x1f0] sm:$0xff]
          %v391 = vld [vmem:[%s281 + $0x1f8] sm:$0xff]
          %v392 = vld [vmem:[%s281 + $0x200] sm:$0xff]
          %v393 = vld [vmem:[%s281 + $0x208] sm:$0xff]
          %v394 = vld [vmem:[%s281 + $0x210] sm:$0xff]
          %v395 = vld [vmem:[%s281 + $0x218] sm:$0xff]
          %v396 = vld [vmem:[%s281 + $0x220] sm:$0xff]
          %v397 = vld [vmem:[%s281 + $0x228] sm:$0xff]
          %v398 = vld [vmem:[%s281 + $0x230] sm:$0xff]
          %v399 = vld [vmem:[%s281 + $0x238] sm:$0xff]
          %v400 = vld [vmem:[%s281 + $0x240] sm:$0xff]
          %v401 = vld [vmem:[%s281 + $0x248] sm:$0xff]
          %v402 = vld [vmem:[%s281 + $0x250] sm:$0xff]
          %v403 = vld [vmem:[%s281 + $0x258] sm:$0xff]
          %v404 = vld [vmem:[%s281 + $0x260] sm:$0xff]
          %v405 = vld [vmem:[%s281 + $0x268] sm:$0xff]
          %v406 = vld [vmem:[%s281 + $0x270] sm:$0xff]
          %v407 = vld [vmem:[%s281 + $0x278] sm:$0xff]
          %v408 = vld [vmem:[%s281 + $0x280] sm:$0xff]
          %v409 = vld [vmem:[%s281 + $0x288] sm:$0xff]
          %v410 = vld [vmem:[%s281 + $0x290] sm:$0xff]
          %v411 = vld [vmem:[%s281 + $0x298] sm:$0xff]
          %v412 = vld [vmem:[%s281 + $0x2a0] sm:$0xff]
          %v413 = vld [vmem:[%s281 + $0x2a8] sm:$0xff]
          %v414 = vld [vmem:[%s281 + $0x2b0] sm:$0xff]
          %v415 = vld [vmem:[%s281 + $0x2b8] sm:$0xff]
          %v416 = vld [vmem:[%s281 + $0x2c0] sm:$0xff]
          %v417 = vld [vmem:[%s281 + $0x2c8] sm:$0xff]
          %v418 = vld [vmem:[%s281 + $0x2d0] sm:$0xff]
          %v419 = vld [vmem:[%s281 + $0x2d8] sm:$0xff]
          %v420 = vld [vmem:[%s281 + $0x2e0] sm:$0xff]
          %v421 = vld [vmem:[%s281 + $0x2e8] sm:$0xff]
          %v422 = vld [vmem:[%s281 + $0x2f0] sm:$0xff]
          %v423 = vld [vmem:[%s281 + $0x2f8] sm:$0xff]
          %v424 = vld [vmem:[%s281 + $0x300] sm:$0xff]
          %v425 = vld [vmem:[%s281 + $0x308] sm:$0xff]
          %v426 = vld [vmem:[%s281 + $0x310] sm:$0xff]
          %v427 = vld [vmem:[%s281 + $0x318] sm:$0xff]
          %v428 = vld [vmem:[%s281 + $0x320] sm:$0xff]
          %v429 = vld [vmem:[%s281 + $0x328] sm:$0xff]
          %v430 = vld [vmem:[%s281 + $0x330] sm:$0xff]
          %v431 = vld [vmem:[%s281 + $0x338] sm:$0xff]
          %v432 = vld [vmem:[%s281 + $0x340] sm:$0xff]
          %v433 = vld [vmem:[%s281 + $0x348] sm:$0xff]
          %v434 = vld [vmem:[%s281 + $0x350] sm:$0xff]
          %v435 = vld [vmem:[%s281 + $0x358] sm:$0xff]
          %v436 = vld [vmem:[%s281 + $0x360] sm:$0xff]
          %v437 = vld [vmem:[%s281 + $0x368] sm:$0xff]
          %v438 = vld [vmem:[%s281 + $0x370] sm:$0xff]
          %v439 = vld [vmem:[%s281 + $0x378] sm:$0xff]
          %v440 = vld [vmem:[%s281 + $0x380] sm:$0xff]
          %v441 = vld [vmem:[%s281 + $0x388] sm:$0xff]
          %v442 = vld [vmem:[%s281 + $0x390] sm:$0xff]
          %v443 = vld [vmem:[%s281 + $0x398] sm:$0xff]
          %v444 = vld [vmem:[%s281 + $0x3a0] sm:$0xff]
          %v445 = vld [vmem:[%s281 + $0x3a8] sm:$0xff]
          %v446 = vld [vmem:[%s281 + $0x3b0] sm:$0xff]
          %v447 = vld [vmem:[%s281 + $0x3b8] sm:$0xff]
          %v448 = vld [vmem:[%s281 + $0x3c0] sm:$0xff]
          %v449 = vld [vmem:[%s281 + $0x3c8] sm:$0xff]
          %v450 = vld [vmem:[%s281 + $0x3d0] sm:$0xff]
          %v451 = vld [vmem:[%s281 + $0x3d8] sm:$0xff]
          %v452 = vld [vmem:[%s281 + $0x3e0] sm:$0xff]
          %v453 = vld [vmem:[%s281 + $0x3e8] sm:$0xff]
          %v454 = vld [vmem:[%s281 + $0x3f0] sm:$0xff]
          %v455 = vld [vmem:[%s281 + $0x3f8] sm:$0xff]
          %v456 = vunpack.c.l.bf16 %v328
          %v457 = vunpack.c.h.bf16 %v328
          %v458 = vunpack.c.l.bf16 %v329
          %v459 = vunpack.c.h.bf16 %v329
          %v460 = vunpack.c.l.bf16 %v330
          %v461 = vunpack.c.h.bf16 %v330
          %v462 = vunpack.c.l.bf16 %v331
          %v463 = vunpack.c.h.bf16 %v331
          %v464 = vunpack.c.l.bf16 %v332
          %v465 = vunpack.c.h.bf16 %v332
          %v466 = vunpack.c.l.bf16 %v333
          %v467 = vunpack.c.h.bf16 %v333
          %v468 = vunpack.c.l.bf16 %v334
          %v469 = vunpack.c.h.bf16 %v334
          %v470 = vunpack.c.l.bf16 %v335
          %v471 = vunpack.c.h.bf16 %v335
          %v472 = vunpack.c.l.bf16 %v336
          %v473 = vunpack.c.h.bf16 %v336
          %v474 = vunpack.c.l.bf16 %v337
          %v475 = vunpack.c.h.bf16 %v337
          %v476 = vunpack.c.l.bf16 %v338
          %v477 = vunpack.c.h.bf16 %v338
          %v478 = vunpack.c.l.bf16 %v339
          %v479 = vunpack.c.h.bf16 %v339
          %v480 = vunpack.c.l.bf16 %v340
          %v481 = vunpack.c.h.bf16 %v340
          %v482 = vunpack.c.l.bf16 %v341
          %v483 = vunpack.c.h.bf16 %v341
          %v484 = vunpack.c.l.bf16 %v342
          %v485 = vunpack.c.h.bf16 %v342
          %v486 = vunpack.c.l.bf16 %v343
          %v487 = vunpack.c.h.bf16 %v343
          %v488 = vunpack.c.l.bf16 %v344
          %v489 = vunpack.c.h.bf16 %v344
          %v490 = vunpack.c.l.bf16 %v345
          %v491 = vunpack.c.h.bf16 %v345
          %v492 = vunpack.c.l.bf16 %v346
          %v493 = vunpack.c.h.bf16 %v346
          %v494 = vunpack.c.l.bf16 %v347
          %v495 = vunpack.c.h.bf16 %v347
          %v496 = vunpack.c.l.bf16 %v348
          %v497 = vunpack.c.h.bf16 %v348
          %v498 = vunpack.c.l.bf16 %v349
          %v499 = vunpack.c.h.bf16 %v349
          %v500 = vunpack.c.l.bf16 %v350
          %v501 = vunpack.c.h.bf16 %v350
          %v502 = vunpack.c.l.bf16 %v351
          %v503 = vunpack.c.h.bf16 %v351
          %v504 = vunpack.c.l.bf16 %v352
          %v505 = vunpack.c.h.bf16 %v352
          %v506 = vunpack.c.l.bf16 %v353
          %v507 = vunpack.c.h.bf16 %v353
          %v508 = vunpack.c.l.bf16 %v354
          %v509 = vunpack.c.h.bf16 %v354
          %v510 = vunpack.c.l.bf16 %v355
          %v511 = vunpack.c.h.bf16 %v355
          %v512 = vunpack.c.l.bf16 %v356
          %v513 = vunpack.c.h.bf16 %v356
          %v514 = vunpack.c.l.bf16 %v357
          %v515 = vunpack.c.h.bf16 %v357
          %v516 = vunpack.c.l.bf16 %v358
          %v517 = vunpack.c.h.bf16 %v358
          %v518 = vunpack.c.l.bf16 %v359
          %v519 = vunpack.c.h.bf16 %v359
          %v520 = vunpack.c.l.bf16 %v360
          %v521 = vunpack.c.h.bf16 %v360
          %v522 = vunpack.c.l.bf16 %v361
          %v523 = vunpack.c.h.bf16 %v361
          %v524 = vunpack.c.l.bf16 %v362
          %v525 = vunpack.c.h.bf16 %v362
          %v526 = vunpack.c.l.bf16 %v363
          %v527 = vunpack.c.h.bf16 %v363
          %v528 = vunpack.c.l.bf16 %v364
          %v529 = vunpack.c.h.bf16 %v364
          %v530 = vunpack.c.l.bf16 %v365
          %v531 = vunpack.c.h.bf16 %v365
          %v532 = vunpack.c.l.bf16 %v366
          %v533 = vunpack.c.h.bf16 %v366
          %v534 = vunpack.c.l.bf16 %v367
          %v535 = vunpack.c.h.bf16 %v367
          %v536 = vunpack.c.l.bf16 %v368
          %v537 = vunpack.c.h.bf16 %v368
          %v538 = vunpack.c.l.bf16 %v369
          %v539 = vunpack.c.h.bf16 %v369
          %v540 = vunpack.c.l.bf16 %v370
          %v541 = vunpack.c.h.bf16 %v370
          %v542 = vunpack.c.l.bf16 %v371
          %v543 = vunpack.c.h.bf16 %v371
          %v544 = vunpack.c.l.bf16 %v372
          %v545 = vunpack.c.h.bf16 %v372
          %v546 = vunpack.c.l.bf16 %v373
          %v547 = vunpack.c.h.bf16 %v373
          %v548 = vunpack.c.l.bf16 %v374
          %v549 = vunpack.c.h.bf16 %v374
          %v550 = vunpack.c.l.bf16 %v375
          %v551 = vunpack.c.h.bf16 %v375
          %v552 = vunpack.c.l.bf16 %v376
          %v553 = vunpack.c.h.bf16 %v376
          %v554 = vunpack.c.l.bf16 %v377
          %v555 = vunpack.c.h.bf16 %v377
          %v556 = vunpack.c.l.bf16 %v378
          %v557 = vunpack.c.h.bf16 %v378
          %v558 = vunpack.c.l.bf16 %v379
          %v559 = vunpack.c.h.bf16 %v379
          %v560 = vunpack.c.l.bf16 %v380
          %v561 = vunpack.c.h.bf16 %v380
          %v562 = vunpack.c.l.bf16 %v381
          %v563 = vunpack.c.h.bf16 %v381
          %v564 = vunpack.c.l.bf16 %v382
          %v565 = vunpack.c.h.bf16 %v382
          %v566 = vunpack.c.l.bf16 %v383
          %v567 = vunpack.c.h.bf16 %v383
          %v568 = vunpack.c.l.bf16 %v384
          %v569 = vunpack.c.h.bf16 %v384
          %v570 = vunpack.c.l.bf16 %v385
          %v571 = vunpack.c.h.bf16 %v385
          %v572 = vunpack.c.l.bf16 %v386
          %v573 = vunpack.c.h.bf16 %v386
          %v574 = vunpack.c.l.bf16 %v387
          %v575 = vunpack.c.h.bf16 %v387
          %v576 = vunpack.c.l.bf16 %v388
          %v577 = vunpack.c.h.bf16 %v388
          %v578 = vunpack.c.l.bf16 %v389
          %v579 = vunpack.c.h.bf16 %v389
          %v580 = vunpack.c.l.bf16 %v390
          %v581 = vunpack.c.h.bf16 %v390
          %v582 = vunpack.c.l.bf16 %v391
          %v583 = vunpack.c.h.bf16 %v391
          %v584 = vunpack.c.l.bf16 %v392
          %v585 = vunpack.c.h.bf16 %v392
          %v586 = vunpack.c.l.bf16 %v393
          %v587 = vunpack.c.h.bf16 %v393
          %v588 = vunpack.c.l.bf16 %v394
          %v589 = vunpack.c.h.bf16 %v394
          %v590 = vunpack.c.l.bf16 %v395
          %v591 = vunpack.c.h.bf16 %v395
          %v592 = vunpack.c.l.bf16 %v396
          %v593 = vunpack.c.h.bf16 %v396
          %v594 = vunpack.c.l.bf16 %v397
          %v595 = vunpack.c.h.bf16 %v397
          %v596 = vunpack.c.l.bf16 %v398
          %v597 = vunpack.c.h.bf16 %v398
          %v598 = vunpack.c.l.bf16 %v399
          %v599 = vunpack.c.h.bf16 %v399
          %v600 = vunpack.c.l.bf16 %v400
          %v601 = vunpack.c.h.bf16 %v400
          %v602 = vunpack.c.l.bf16 %v401
          %v603 = vunpack.c.h.bf16 %v401
          %v604 = vunpack.c.l.bf16 %v402
          %v605 = vunpack.c.h.bf16 %v402
          %v606 = vunpack.c.l.bf16 %v403
          %v607 = vunpack.c.h.bf16 %v403
          %v608 = vunpack.c.l.bf16 %v404
          %v609 = vunpack.c.h.bf16 %v404
          %v610 = vunpack.c.l.bf16 %v405
          %v611 = vunpack.c.h.bf16 %v405
          %v612 = vunpack.c.l.bf16 %v406
          %v613 = vunpack.c.h.bf16 %v406
          %v614 = vunpack.c.l.bf16 %v407
          %v615 = vunpack.c.h.bf16 %v407
          %v616 = vunpack.c.l.bf16 %v408
          %v617 = vunpack.c.h.bf16 %v408
          %v618 = vunpack.c.l.bf16 %v409
          %v619 = vunpack.c.h.bf16 %v409
          %v620 = vunpack.c.l.bf16 %v410
          %v621 = vunpack.c.h.bf16 %v410
          %v622 = vunpack.c.l.bf16 %v411
          %v623 = vunpack.c.h.bf16 %v411
          %v624 = vunpack.c.l.bf16 %v412
          %v625 = vunpack.c.h.bf16 %v412
          %v626 = vunpack.c.l.bf16 %v413
          %v627 = vunpack.c.h.bf16 %v413
          %v628 = vunpack.c.l.bf16 %v414
          %v629 = vunpack.c.h.bf16 %v414
          %v630 = vunpack.c.l.bf16 %v415
          %v631 = vunpack.c.h.bf16 %v415
          %v632 = vunpack.c.l.bf16 %v416
          %v633 = vunpack.c.h.bf16 %v416
          %v634 = vunpack.c.l.bf16 %v417
          %v635 = vunpack.c.h.bf16 %v417
          %v636 = vunpack.c.l.bf16 %v418
          %v637 = vunpack.c.h.bf16 %v418
          %v638 = vunpack.c.l.bf16 %v419
          %v639 = vunpack.c.h.bf16 %v419
          %v640 = vunpack.c.l.bf16 %v420
          %v641 = vunpack.c.h.bf16 %v420
          %v642 = vunpack.c.l.bf16 %v421
          %v643 = vunpack.c.h.bf16 %v421
          %v644 = vunpack.c.l.bf16 %v422
          %v645 = vunpack.c.h.bf16 %v422
          %v646 = vunpack.c.l.bf16 %v423
          %v647 = vunpack.c.h.bf16 %v423
          %v648 = vunpack.c.l.bf16 %v424
          %v649 = vunpack.c.h.bf16 %v424
          %v650 = vunpack.c.l.bf16 %v425
          %v651 = vunpack.c.h.bf16 %v425
          %v652 = vunpack.c.l.bf16 %v426
          %v653 = vunpack.c.h.bf16 %v426
          %v654 = vunpack.c.l.bf16 %v427
          %v655 = vunpack.c.h.bf16 %v427
          %v656 = vunpack.c.l.bf16 %v428
          %v657 = vunpack.c.h.bf16 %v428
          %v658 = vunpack.c.l.bf16 %v429
          %v659 = vunpack.c.h.bf16 %v429
          %v660 = vunpack.c.l.bf16 %v430
          %v661 = vunpack.c.h.bf16 %v430
          %v662 = vunpack.c.l.bf16 %v431
          %v663 = vunpack.c.h.bf16 %v431
          %v664 = vunpack.c.l.bf16 %v432
          %v665 = vunpack.c.h.bf16 %v432
          %v666 = vunpack.c.l.bf16 %v433
          %v667 = vunpack.c.h.bf16 %v433
          %v668 = vunpack.c.l.bf16 %v434
          %v669 = vunpack.c.h.bf16 %v434
          %v670 = vunpack.c.l.bf16 %v435
          %v671 = vunpack.c.h.bf16 %v435
          %v672 = vunpack.c.l.bf16 %v436
          %v673 = vunpack.c.h.bf16 %v436
          %v674 = vunpack.c.l.bf16 %v437
          %v675 = vunpack.c.h.bf16 %v437
          %v676 = vunpack.c.l.bf16 %v438
          %v677 = vunpack.c.h.bf16 %v438
          %v678 = vunpack.c.l.bf16 %v439
          %v679 = vunpack.c.h.bf16 %v439
          %v680 = vunpack.c.l.bf16 %v440
          %v681 = vunpack.c.h.bf16 %v440
          %v682 = vunpack.c.l.bf16 %v441
          %v683 = vunpack.c.h.bf16 %v441
          %v684 = vunpack.c.l.bf16 %v442
          %v685 = vunpack.c.h.bf16 %v442
          %v686 = vunpack.c.l.bf16 %v443
          %v687 = vunpack.c.h.bf16 %v443
          %v688 = vunpack.c.l.bf16 %v444
          %v689 = vunpack.c.h.bf16 %v444
          %v690 = vunpack.c.l.bf16 %v445
          %v691 = vunpack.c.h.bf16 %v445
          %v692 = vunpack.c.l.bf16 %v446
          %v693 = vunpack.c.h.bf16 %v446
          %v694 = vunpack.c.l.bf16 %v447
          %v695 = vunpack.c.h.bf16 %v447
          %v696 = vunpack.c.l.bf16 %v448
          %v697 = vunpack.c.h.bf16 %v448
          %v698 = vunpack.c.l.bf16 %v449
          %v699 = vunpack.c.h.bf16 %v449
          %v700 = vunpack.c.l.bf16 %v450
          %v701 = vunpack.c.h.bf16 %v450
          %v702 = vunpack.c.l.bf16 %v451
          %v703 = vunpack.c.h.bf16 %v451
          %v704 = vunpack.c.l.bf16 %v452
          %v705 = vunpack.c.h.bf16 %v452
          %v706 = vunpack.c.l.bf16 %v453
          %v707 = vunpack.c.h.bf16 %v453
          %v708 = vunpack.c.l.bf16 %v454
          %v709 = vunpack.c.h.bf16 %v454
          %v710 = vunpack.c.l.bf16 %v455
          %v711 = vunpack.c.h.bf16 %v455
          %v712 = vadd.f32 %v456, %v458
          %v713 = vadd.f32 %v712, %v460
          %v714 = vadd.f32 %v713, %v462
          %v715 = vadd.f32 %v714, %v464
          %v716 = vadd.f32 %v715, %v466
          %v717 = vadd.f32 %v716, %v468
          %v718 = vadd.f32 %v717, %v470
          %v719 = vadd.f32 %v718, %v472
          %v720 = vadd.f32 %v719, %v474
          %v721 = vadd.f32 %v720, %v476
          %v722 = vadd.f32 %v721, %v478
          %v723 = vadd.f32 %v722, %v480
          %v724 = vadd.f32 %v723, %v482
          %v725 = vadd.f32 %v724, %v484
          %v726 = vadd.f32 %v725, %v486
          %v727 = vrot.slane %v726, 4
          %v728 = vadd.f32 %v726, %v727
          %v729 = vrot.slane %v728, 2
          %v730 = vadd.f32 %v728, %v729
          %v731 = vrot.slane %v730, 1
          %v732 = vadd.f32 %v730, %v731
          %v733 = vadd.f32 %v457, %v459
          %v734 = vadd.f32 %v733, %v461
          %v735 = vadd.f32 %v734, %v463
          %v736 = vadd.f32 %v735, %v465
          %v737 = vadd.f32 %v736, %v467
          %v738 = vadd.f32 %v737, %v469
          %v739 = vadd.f32 %v738, %v471
          %v740 = vadd.f32 %v739, %v473
          %v741 = vadd.f32 %v740, %v475
          %v742 = vadd.f32 %v741, %v477
          %v743 = vadd.f32 %v742, %v479
          %v744 = vadd.f32 %v743, %v481
          %v745 = vadd.f32 %v744, %v483
          %v746 = vadd.f32 %v745, %v485
          %v747 = vadd.f32 %v746, %v487
          %v748 = vrot.slane %v747, 4
          %v749 = vadd.f32 %v747, %v748
          %v750 = vrot.slane %v749, 2
          %v751 = vadd.f32 %v749, %v750
          %v752 = vrot.slane %v751, 1
          %v753 = vadd.f32 %v751, %v752
          %v754 = vadd.f32 %v488, %v490
          %v755 = vadd.f32 %v754, %v492
          %v756 = vadd.f32 %v755, %v494
          %v757 = vadd.f32 %v756, %v496
          %v758 = vadd.f32 %v757, %v498
          %v759 = vadd.f32 %v758, %v500
          %v760 = vadd.f32 %v759, %v502
          %v761 = vadd.f32 %v760, %v504
          %v762 = vadd.f32 %v761, %v506
          %v763 = vadd.f32 %v762, %v508
          %v764 = vadd.f32 %v763, %v510
          %v765 = vadd.f32 %v764, %v512
          %v766 = vadd.f32 %v765, %v514
          %v767 = vadd.f32 %v766, %v516
          %v768 = vadd.f32 %v767, %v518
          %v769 = vrot.slane %v768, 4
          %v770 = vadd.f32 %v768, %v769
          %v771 = vrot.slane %v770, 2
          %v772 = vadd.f32 %v770, %v771
          %v773 = vrot.slane %v772, 1
          %v774 = vadd.f32 %v772, %v773
          %v775 = vadd.f32 %v489, %v491
          %v776 = vadd.f32 %v775, %v493
          %v777 = vadd.f32 %v776, %v495
          %v778 = vadd.f32 %v777, %v497
          %v779 = vadd.f32 %v778, %v499
          %v780 = vadd.f32 %v779, %v501
          %v781 = vadd.f32 %v780, %v503
          %v782 = vadd.f32 %v781, %v505
          %v783 = vadd.f32 %v782, %v507
          %v784 = vadd.f32 %v783, %v509
          %v785 = vadd.f32 %v784, %v511
          %v786 = vadd.f32 %v785, %v513
          %v787 = vadd.f32 %v786, %v515
          %v788 = vadd.f32 %v787, %v517
          %v789 = vadd.f32 %v788, %v519
          %v790 = vrot.slane %v789, 4
          %v791 = vadd.f32 %v789, %v790
          %v792 = vrot.slane %v791, 2
          %v793 = vadd.f32 %v791, %v792
          %v794 = vrot.slane %v793, 1
          %v795 = vadd.f32 %v793, %v794
          %v796 = vadd.f32 %v520, %v522
          %v797 = vadd.f32 %v796, %v524
          %v798 = vadd.f32 %v797, %v526
          %v799 = vadd.f32 %v798, %v528
          %v800 = vadd.f32 %v799, %v530
          %v801 = vadd.f32 %v800, %v532
          %v802 = vadd.f32 %v801, %v534
          %v803 = vadd.f32 %v802, %v536
          %v804 = vadd.f32 %v803, %v538
          %v805 = vadd.f32 %v804, %v540
          %v806 = vadd.f32 %v805, %v542
          %v807 = vadd.f32 %v806, %v544
          %v808 = vadd.f32 %v807, %v546
          %v809 = vadd.f32 %v808, %v548
          %v810 = vadd.f32 %v809, %v550
          %v811 = vrot.slane %v810, 4
          %v812 = vadd.f32 %v810, %v811
          %v813 = vrot.slane %v812, 2
          %v814 = vadd.f32 %v812, %v813
          %v815 = vrot.slane %v814, 1
          %v816 = vadd.f32 %v814, %v815
          %v817 = vadd.f32 %v521, %v523
          %v818 = vadd.f32 %v817, %v525
          %v819 = vadd.f32 %v818, %v527
          %v820 = vadd.f32 %v819, %v529
          %v821 = vadd.f32 %v820, %v531
          %v822 = vadd.f32 %v821, %v533
          %v823 = vadd.f32 %v822, %v535
          %v824 = vadd.f32 %v823, %v537
          %v825 = vadd.f32 %v824, %v539
          %v826 = vadd.f32 %v825, %v541
          %v827 = vadd.f32 %v826, %v543
          %v828 = vadd.f32 %v827, %v545
          %v829 = vadd.f32 %v828, %v547
          %v830 = vadd.f32 %v829, %v549
          %v831 = vadd.f32 %v830, %v551
          %v832 = vrot.slane %v831, 4
          %v833 = vadd.f32 %v831, %v832
          %v834 = vrot.slane %v833, 2
          %v835 = vadd.f32 %v833, %v834
          %v836 = vrot.slane %v835, 1
          %v837 = vadd.f32 %v835, %v836
          %v838 = vadd.f32 %v552, %v554
          %v839 = vadd.f32 %v838, %v556
          %v840 = vadd.f32 %v839, %v558
          %v841 = vadd.f32 %v840, %v560
          %v842 = vadd.f32 %v841, %v562
          %v843 = vadd.f32 %v842, %v564
          %v844 = vadd.f32 %v843, %v566
          %v845 = vadd.f32 %v844, %v568
          %v846 = vadd.f32 %v845, %v570
          %v847 = vadd.f32 %v846, %v572
          %v848 = vadd.f32 %v847, %v574
          %v849 = vadd.f32 %v848, %v576
          %v850 = vadd.f32 %v849, %v578
          %v851 = vadd.f32 %v850, %v580
          %v852 = vadd.f32 %v851, %v582
          %v853 = vrot.slane %v852, 4
          %v854 = vadd.f32 %v852, %v853
          %v855 = vrot.slane %v854, 2
          %v856 = vadd.f32 %v854, %v855
          %v857 = vrot.slane %v856, 1
          %v858 = vadd.f32 %v856, %v857
          %v859 = vadd.f32 %v553, %v555
          %v860 = vadd.f32 %v859, %v557
          %v861 = vadd.f32 %v860, %v559
          %v862 = vadd.f32 %v861, %v561
          %v863 = vadd.f32 %v862, %v563
          %v864 = vadd.f32 %v863, %v565
          %v865 = vadd.f32 %v864, %v567
          %v866 = vadd.f32 %v865, %v569
          %v867 = vadd.f32 %v866, %v571
          %v868 = vadd.f32 %v867, %v573
          %v869 = vadd.f32 %v868, %v575
          %v870 = vadd.f32 %v869, %v577
          %v871 = vadd.f32 %v870, %v579
          %v872 = vadd.f32 %v871, %v581
          %v873 = vadd.f32 %v872, %v583
          %v874 = vrot.slane %v873, 4
          %v875 = vadd.f32 %v873, %v874
          %v876 = vrot.slane %v875, 2
          %v877 = vadd.f32 %v875, %v876
          %v878 = vrot.slane %v877, 1
          %v879 = vadd.f32 %v877, %v878
          %v880 = vadd.f32 %v584, %v586
          %v881 = vadd.f32 %v880, %v588
          %v882 = vadd.f32 %v881, %v590
          %v883 = vadd.f32 %v882, %v592
          %v884 = vadd.f32 %v883, %v594
          %v885 = vadd.f32 %v884, %v596
          %v886 = vadd.f32 %v885, %v598
          %v887 = vadd.f32 %v886, %v600
          %v888 = vadd.f32 %v887, %v602
          %v889 = vadd.f32 %v888, %v604
          %v890 = vadd.f32 %v889, %v606
          %v891 = vadd.f32 %v890, %v608
          %v892 = vadd.f32 %v891, %v610
          %v893 = vadd.f32 %v892, %v612
          %v894 = vadd.f32 %v893, %v614
          %v895 = vrot.slane %v894, 4
          %v896 = vadd.f32 %v894, %v895
          %v897 = vrot.slane %v896, 2
          %v898 = vadd.f32 %v896, %v897
          %v899 = vrot.slane %v898, 1
          %v900 = vadd.f32 %v898, %v899
          %v901 = vadd.f32 %v585, %v587
          %v902 = vadd.f32 %v901, %v589
          %v903 = vadd.f32 %v902, %v591
          %v904 = vadd.f32 %v903, %v593
          %v905 = vadd.f32 %v904, %v595
          %v906 = vadd.f32 %v905, %v597
          %v907 = vadd.f32 %v906, %v599
          %v908 = vadd.f32 %v907, %v601
          %v909 = vadd.f32 %v908, %v603
          %v910 = vadd.f32 %v909, %v605
          %v911 = vadd.f32 %v910, %v607
          %v912 = vadd.f32 %v911, %v609
          %v913 = vadd.f32 %v912, %v611
          %v914 = vadd.f32 %v913, %v613
          %v915 = vadd.f32 %v914, %v615
          %v916 = vrot.slane %v915, 4
          %v917 = vadd.f32 %v915, %v916
          %v918 = vrot.slane %v917, 2
          %v919 = vadd.f32 %v917, %v918
          %v920 = vrot.slane %v919, 1
          %v921 = vadd.f32 %v919, %v920
          %v922 = vadd.f32 %v616, %v618
          %v923 = vadd.f32 %v922, %v620
          %v924 = vadd.f32 %v923, %v622
          %v925 = vadd.f32 %v924, %v624
          %v926 = vadd.f32 %v925, %v626
          %v927 = vadd.f32 %v926, %v628
          %v928 = vadd.f32 %v927, %v630
          %v929 = vadd.f32 %v928, %v632
          %v930 = vadd.f32 %v929, %v634
          %v931 = vadd.f32 %v930, %v636
          %v932 = vadd.f32 %v931, %v638
          %v933 = vadd.f32 %v932, %v640
          %v934 = vadd.f32 %v933, %v642
          %v935 = vadd.f32 %v934, %v644
          %v936 = vadd.f32 %v935, %v646
          %v937 = vrot.slane %v936, 4
          %v938 = vadd.f32 %v936, %v937
          %v939 = vrot.slane %v938, 2
          %v940 = vadd.f32 %v938, %v939
          %v941 = vrot.slane %v940, 1
          %v942 = vadd.f32 %v940, %v941
          %v943 = vadd.f32 %v617, %v619
          %v944 = vadd.f32 %v943, %v621
          %v945 = vadd.f32 %v944, %v623
          %v946 = vadd.f32 %v945, %v625
          %v947 = vadd.f32 %v946, %v627
          %v948 = vadd.f32 %v947, %v629
          %v949 = vadd.f32 %v948, %v631
          %v950 = vadd.f32 %v949, %v633
          %v951 = vadd.f32 %v950, %v635
          %v952 = vadd.f32 %v951, %v637
          %v953 = vadd.f32 %v952, %v639
          %v954 = vadd.f32 %v953, %v641
          %v955 = vadd.f32 %v954, %v643
          %v956 = vadd.f32 %v955, %v645
          %v957 = vadd.f32 %v956, %v647
          %v958 = vrot.slane %v957, 4
          %v959 = vadd.f32 %v957, %v958
          %v960 = vrot.slane %v959, 2
          %v961 = vadd.f32 %v959, %v960
          %v962 = vrot.slane %v961, 1
          %v963 = vadd.f32 %v961, %v962
          %v964 = vadd.f32 %v648, %v650
          %v965 = vadd.f32 %v964, %v652
          %v966 = vadd.f32 %v965, %v654
          %v967 = vadd.f32 %v966, %v656
          %v968 = vadd.f32 %v967, %v658
          %v969 = vadd.f32 %v968, %v660
          %v970 = vadd.f32 %v969, %v662
          %v971 = vadd.f32 %v970, %v664
          %v972 = vadd.f32 %v971, %v666
          %v973 = vadd.f32 %v972, %v668
          %v974 = vadd.f32 %v973, %v670
          %v975 = vadd.f32 %v974, %v672
          %v976 = vadd.f32 %v975, %v674
          %v977 = vadd.f32 %v976, %v676
          %v978 = vadd.f32 %v977, %v678
          %v979 = vrot.slane %v978, 4
          %v980 = vadd.f32 %v978, %v979
          %v981 = vrot.slane %v980, 2
          %v982 = vadd.f32 %v980, %v981
          %v983 = vrot.slane %v982, 1
          %v984 = vadd.f32 %v982, %v983
          %v985 = vadd.f32 %v649, %v651
          %v986 = vadd.f32 %v985, %v653
          %v987 = vadd.f32 %v986, %v655
          %v988 = vadd.f32 %v987, %v657
          %v989 = vadd.f32 %v988, %v659
          %v990 = vadd.f32 %v989, %v661
          %v991 = vadd.f32 %v990, %v663
          %v992 = vadd.f32 %v991, %v665
          %v993 = vadd.f32 %v992, %v667
          %v994 = vadd.f32 %v993, %v669
          %v995 = vadd.f32 %v994, %v671
          %v996 = vadd.f32 %v995, %v673
          %v997 = vadd.f32 %v996, %v675
          %v998 = vadd.f32 %v997, %v677
          %v999 = vadd.f32 %v998, %v679
          %v1000 = vrot.slane %v999, 4
          %v1001 = vadd.f32 %v999, %v1000
          %v1002 = vrot.slane %v1001, 2
          %v1003 = vadd.f32 %v1001, %v1002
          %v1004 = vrot.slane %v1003, 1
          %v1005 = vadd.f32 %v1003, %v1004
          %v1006 = vadd.f32 %v680, %v682
          %v1007 = vadd.f32 %v1006, %v684
          %v1008 = vadd.f32 %v1007, %v686
          %v1009 = vadd.f32 %v1008, %v688
          %v1010 = vadd.f32 %v1009, %v690
          %v1011 = vadd.f32 %v1010, %v692
          %v1012 = vadd.f32 %v1011, %v694
          %v1013 = vadd.f32 %v1012, %v696
          %v1014 = vadd.f32 %v1013, %v698
          %v1015 = vadd.f32 %v1014, %v700
          %v1016 = vadd.f32 %v1015, %v702
          %v1017 = vadd.f32 %v1016, %v704
          %v1018 = vadd.f32 %v1017, %v706
          %v1019 = vadd.f32 %v1018, %v708
          %v1020 = vadd.f32 %v1019, %v710
          %v1021 = vrot.slane %v1020, 4
          %v1022 = vadd.f32 %v1020, %v1021
          %v1023 = vrot.slane %v1022, 2
          %v1024 = vadd.f32 %v1022, %v1023
          %v1025 = vrot.slane %v1024, 1
          %v1026 = vadd.f32 %v1024, %v1025
          %v1027 = vadd.f32 %v681, %v683
          %v1028 = vadd.f32 %v1027, %v685
          %v1029 = vadd.f32 %v1028, %v687
          %v1030 = vadd.f32 %v1029, %v689
          %v1031 = vadd.f32 %v1030, %v691
          %v1032 = vadd.f32 %v1031, %v693
          %v1033 = vadd.f32 %v1032, %v695
          %v1034 = vadd.f32 %v1033, %v697
          %v1035 = vadd.f32 %v1034, %v699
          %v1036 = vadd.f32 %v1035, %v701
          %v1037 = vadd.f32 %v1036, %v703
          %v1038 = vadd.f32 %v1037, %v705
          %v1039 = vadd.f32 %v1038, %v707
          %v1040 = vadd.f32 %v1039, %v709
          %v1041 = vadd.f32 %v1040, %v711
          %v1042 = vrot.slane %v1041, 4
          %v1043 = vadd.f32 %v1041, %v1042
          %v1044 = vrot.slane %v1043, 2
          %v1045 = vadd.f32 %v1043, %v1044
          %v1046 = vrot.slane %v1045, 1
          %v1047 = vadd.f32 %v1045, %v1046
          %vm1064 = vcmask 1041409
          %v1065 = vsel %vm1064, %v774, %v732
          %vm1066 = vcmask 1042434
          %v1067 = vsel %vm1066, %v816, %v1065
          %vm1068 = vcmask 1043459
          %v1069 = vsel %vm1068, %v858, %v1067
          %vm1070 = vcmask 1044484
          %v1071 = vsel %vm1070, %v900, %v1069
          %vm1072 = vcmask 1045509
          %v1073 = vsel %vm1072, %v942, %v1071
          %vm1074 = vcmask 1046534
          %v1075 = vsel %vm1074, %v984, %v1073
          %vm1076 = vcmask 1047559
          %v1077 = vsel %vm1076, %v1026, %v1075
          %v1078 = vsel %vm1064, %v795, %v753
          %v1079 = vsel %vm1066, %v837, %v1078
          %v1080 = vsel %vm1068, %v879, %v1079
          %v1081 = vsel %vm1070, %v921, %v1080
          %v1082 = vsel %vm1072, %v963, %v1081
          %v1083 = vsel %vm1074, %v1005, %v1082
          %v1084 = vsel %vm1076, %v1047, %v1083
          %v1087 = vadd.f32 %v326, %v1077
          %v1088 = vadd.f32 %v327, %v1084
          %1089 = vst [vmem:[#allocation2] sm:$0xff] %v1087
          %1090 = vst [vmem:[#allocation2 + $0x8] sm:$0xff] %v1088
        $region56: #{tpu_custom_call.1} parent=39 // pred_fallthru
          _
        %p1091 = scmp.eq.s32.totalorder %s28, 1
        // Predicated region
        $region57: #{tpu_custom_call.1} parent=39 // pred_check
          %p1092 = pneg %p1091
        $region58: #{tpu_custom_call.1} parent=39 // pred_check_branch
          %1094 = sbr.rel (%p1092) target = $region60
        $region59: #{tpu_custom_call.1} parent=39 // pred_region
          %v1095 = vld [vmem:[%s281] sm:$0xff]
          %v1096 = vld [vmem:[%s281 + $0x8] sm:$0xff]
          %v1097 = vld [vmem:[%s281 + $0x10] sm:$0xff]
          %v1098 = vld [vmem:[%s281 + $0x18] sm:$0xff]
          %v1099 = vld [vmem:[%s281 + $0x20] sm:$0xff]
          %v1100 = vld [vmem:[%s281 + $0x28] sm:$0xff]
          %v1101 = vld [vmem:[%s281 + $0x30] sm:$0xff]
          %v1102 = vld [vmem:[%s281 + $0x38] sm:$0xff]
          %v1103 = vld [vmem:[%s281 + $0x40] sm:$0xff]
          %v1104 = vld [vmem:[%s281 + $0x48] sm:$0xff]
          %v1105 = vld [vmem:[%s281 + $0x50] sm:$0xff]
          %v1106 = vld [vmem:[%s281 + $0x58] sm:$0xff]
          %v1107 = vld [vmem:[%s281 + $0x60] sm:$0xff]
          %v1108 = vld [vmem:[%s281 + $0x68] sm:$0xff]
          %v1109 = vld [vmem:[%s281 + $0x70] sm:$0xff]
          %v1110 = vld [vmem:[%s281 + $0x78] sm:$0xff]
          %v1111 = vld [vmem:[%s281 + $0x80] sm:$0xff]
          %v1112 = vld [vmem:[%s281 + $0x88] sm:$0xff]
          %v1113 = vld [vmem:[%s281 + $0x90] sm:$0xff]
          %v1114 = vld [vmem:[%s281 + $0x98] sm:$0xff]
          %v1115 = vld [vmem:[%s281 + $0xa0] sm:$0xff]
          %v1116 = vld [vmem:[%s281 + $0xa8] sm:$0xff]
          %v1117 = vld [vmem:[%s281 + $0xb0] sm:$0xff]
          %v1118 = vld [vmem:[%s281 + $0xb8] sm:$0xff]
          %v1119 = vld [vmem:[%s281 + $0xc0] sm:$0xff]
          %v1120 = vld [vmem:[%s281 + $0xc8] sm:$0xff]
          %v1121 = vld [vmem:[%s281 + $0xd0] sm:$0xff]
          %v1122 = vld [vmem:[%s281 + $0xd8] sm:$0xff]
          %v1123 = vld [vmem:[%s281 + $0xe0] sm:$0xff]
          %v1124 = vld [vmem:[%s281 + $0xe8] sm:$0xff]
          %v1125 = vld [vmem:[%s281 + $0xf0] sm:$0xff]
          %v1126 = vld [vmem:[%s281 + $0xf8] sm:$0xff]
          %v1127 = vld [vmem:[%s281 + $0x100] sm:$0xff]
          %v1128 = vld [vmem:[%s281 + $0x108] sm:$0xff]
          %v1129 = vld [vmem:[%s281 + $0x110] sm:$0xff]
          %v1130 = vld [vmem:[%s281 + $0x118] sm:$0xff]
          %v1131 = vld [vmem:[%s281 + $0x120] sm:$0xff]
          %v1132 = vld [vmem:[%s281 + $0x128] sm:$0xff]
          %v1133 = vld [vmem:[%s281 + $0x130] sm:$0xff]
          %v1134 = vld [vmem:[%s281 + $0x138] sm:$0xff]
          %v1135 = vld [vmem:[%s281 + $0x140] sm:$0xff]
          %v1136 = vld [vmem:[%s281 + $0x148] sm:$0xff]
          %v1137 = vld [vmem:[%s281 + $0x150] sm:$0xff]
          %v1138 = vld [vmem:[%s281 + $0x158] sm:$0xff]
          %v1139 = vld [vmem:[%s281 + $0x160] sm:$0xff]
          %v1140 = vld [vmem:[%s281 + $0x168] sm:$0xff]
          %v1141 = vld [vmem:[%s281 + $0x170] sm:$0xff]
          %v1142 = vld [vmem:[%s281 + $0x178] sm:$0xff]
          %v1143 = vld [vmem:[%s281 + $0x180] sm:$0xff]
          %v1144 = vld [vmem:[%s281 + $0x188] sm:$0xff]
          %v1145 = vld [vmem:[%s281 + $0x190] sm:$0xff]
          %v1146 = vld [vmem:[%s281 + $0x198] sm:$0xff]
          %v1147 = vld [vmem:[%s281 + $0x1a0] sm:$0xff]
          %v1148 = vld [vmem:[%s281 + $0x1a8] sm:$0xff]
          %v1149 = vld [vmem:[%s281 + $0x1b0] sm:$0xff]
          %v1150 = vld [vmem:[%s281 + $0x1b8] sm:$0xff]
          %v1151 = vld [vmem:[%s281 + $0x1c0] sm:$0xff]
          %v1152 = vld [vmem:[%s281 + $0x1c8] sm:$0xff]
          %v1153 = vld [vmem:[%s281 + $0x1d0] sm:$0xff]
          %v1154 = vld [vmem:[%s281 + $0x1d8] sm:$0xff]
          %v1155 = vld [vmem:[%s281 + $0x1e0] sm:$0xff]
          %v1156 = vld [vmem:[%s281 + $0x1e8] sm:$0xff]
          %v1157 = vld [vmem:[%s281 + $0x1f0] sm:$0xff]
          %v1158 = vld [vmem:[%s281 + $0x1f8] sm:$0xff]
          %v1159 = vld [vmem:[%s281 + $0x200] sm:$0xff]
          %v1160 = vld [vmem:[%s281 + $0x208] sm:$0xff]
          %v1161 = vld [vmem:[%s281 + $0x210] sm:$0xff]
          %v1162 = vld [vmem:[%s281 + $0x218] sm:$0xff]
          %v1163 = vld [vmem:[%s281 + $0x220] sm:$0xff]
          %v1164 = vld [vmem:[%s281 + $0x228] sm:$0xff]
          %v1165 = vld [vmem:[%s281 + $0x230] sm:$0xff]
          %v1166 = vld [vmem:[%s281 + $0x238] sm:$0xff]
          %v1167 = vld [vmem:[%s281 + $0x240] sm:$0xff]
          %v1168 = vld [vmem:[%s281 + $0x248] sm:$0xff]
          %v1169 = vld [vmem:[%s281 + $0x250] sm:$0xff]
          %v1170 = vld [vmem:[%s281 + $0x258] sm:$0xff]
          %v1171 = vld [vmem:[%s281 + $0x260] sm:$0xff]
          %v1172 = vld [vmem:[%s281 + $0x268] sm:$0xff]
          %v1173 = vld [vmem:[%s281 + $0x270] sm:$0xff]
          %v1174 = vld [vmem:[%s281 + $0x278] sm:$0xff]
          %v1175 = vld [vmem:[%s281 + $0x280] sm:$0xff]
          %v1176 = vld [vmem:[%s281 + $0x288] sm:$0xff]
          %v1177 = vld [vmem:[%s281 + $0x290] sm:$0xff]
          %v1178 = vld [vmem:[%s281 + $0x298] sm:$0xff]
          %v1179 = vld [vmem:[%s281 + $0x2a0] sm:$0xff]
          %v1180 = vld [vmem:[%s281 + $0x2a8] sm:$0xff]
          %v1181 = vld [vmem:[%s281 + $0x2b0] sm:$0xff]
          %v1182 = vld [vmem:[%s281 + $0x2b8] sm:$0xff]
          %v1183 = vld [vmem:[%s281 + $0x2c0] sm:$0xff]
          %v1184 = vld [vmem:[%s281 + $0x2c8] sm:$0xff]
          %v1185 = vld [vmem:[%s281 + $0x2d0] sm:$0xff]
          %v1186 = vld [vmem:[%s281 + $0x2d8] sm:$0xff]
          %v1187 = vld [vmem:[%s281 + $0x2e0] sm:$0xff]
          %v1188 = vld [vmem:[%s281 + $0x2e8] sm:$0xff]
          %v1189 = vld [vmem:[%s281 + $0x2f0] sm:$0xff]
          %v1190 = vld [vmem:[%s281 + $0x2f8] sm:$0xff]
          %v1191 = vld [vmem:[%s281 + $0x300] sm:$0xff]
          %v1192 = vld [vmem:[%s281 + $0x308] sm:$0xff]
          %v1193 = vld [vmem:[%s281 + $0x310] sm:$0xff]
          %v1194 = vld [vmem:[%s281 + $0x318] sm:$0xff]
          %v1195 = vld [vmem:[%s281 + $0x320] sm:$0xff]
          %v1196 = vld [vmem:[%s281 + $0x328] sm:$0xff]
          %v1197 = vld [vmem:[%s281 + $0x330] sm:$0xff]
          %v1198 = vld [vmem:[%s281 + $0x338] sm:$0xff]
          %v1199 = vld [vmem:[%s281 + $0x340] sm:$0xff]
          %v1200 = vld [vmem:[%s281 + $0x348] sm:$0xff]
          %v1201 = vld [vmem:[%s281 + $0x350] sm:$0xff]
          %v1202 = vld [vmem:[%s281 + $0x358] sm:$0xff]
          %v1203 = vld [vmem:[%s281 + $0x360] sm:$0xff]
          %v1204 = vld [vmem:[%s281 + $0x368] sm:$0xff]
          %v1205 = vld [vmem:[%s281 + $0x370] sm:$0xff]
          %v1206 = vld [vmem:[%s281 + $0x378] sm:$0xff]
          %v1207 = vld [vmem:[%s281 + $0x380] sm:$0xff]
          %v1208 = vld [vmem:[%s281 + $0x388] sm:$0xff]
          %v1209 = vld [vmem:[%s281 + $0x390] sm:$0xff]
          %v1210 = vld [vmem:[%s281 + $0x398] sm:$0xff]
          %v1211 = vld [vmem:[%s281 + $0x3a0] sm:$0xff]
          %v1212 = vld [vmem:[%s281 + $0x3a8] sm:$0xff]
          %v1213 = vld [vmem:[%s281 + $0x3b0] sm:$0xff]
          %v1214 = vld [vmem:[%s281 + $0x3b8] sm:$0xff]
          %v1215 = vld [vmem:[%s281 + $0x3c0] sm:$0xff]
          %v1216 = vld [vmem:[%s281 + $0x3c8] sm:$0xff]
          %v1217 = vld [vmem:[%s281 + $0x3d0] sm:$0xff]
          %v1218 = vld [vmem:[%s281 + $0x3d8] sm:$0xff]
          %v1219 = vld [vmem:[%s281 + $0x3e0] sm:$0xff]
          %v1220 = vld [vmem:[%s281 + $0x3e8] sm:$0xff]
          %v1221 = vld [vmem:[%s281 + $0x3f0] sm:$0xff]
          %v1222 = vld [vmem:[%s281 + $0x3f8] sm:$0xff]
          %v1223 = vunpack.c.l.bf16 %v1095
          %v1224 = vunpack.c.h.bf16 %v1095
          %v1225 = vunpack.c.l.bf16 %v1096
          %v1226 = vunpack.c.h.bf16 %v1096
          %v1227 = vunpack.c.l.bf16 %v1097
          %v1228 = vunpack.c.h.bf16 %v1097
          %v1229 = vunpack.c.l.bf16 %v1098
          %v1230 = vunpack.c.h.bf16 %v1098
          %v1231 = vunpack.c.l.bf16 %v1099
          %v1232 = vunpack.c.h.bf16 %v1099
          %v1233 = vunpack.c.l.bf16 %v1100
          %v1234 = vunpack.c.h.bf16 %v1100
          %v1235 = vunpack.c.l.bf16 %v1101
          %v1236 = vunpack.c.h.bf16 %v1101
          %v1237 = vunpack.c.l.bf16 %v1102
          %v1238 = vunpack.c.h.bf16 %v1102
          %v1239 = vunpack.c.l.bf16 %v1103
          %v1240 = vunpack.c.h.bf16 %v1103
          %v1241 = vunpack.c.l.bf16 %v1104
          %v1242 = vunpack.c.h.bf16 %v1104
          %v1243 = vunpack.c.l.bf16 %v1105
          %v1244 = vunpack.c.h.bf16 %v1105
          %v1245 = vunpack.c.l.bf16 %v1106
          %v1246 = vunpack.c.h.bf16 %v1106
          %v1247 = vunpack.c.l.bf16 %v1107
          %v1248 = vunpack.c.h.bf16 %v1107
          %v1249 = vunpack.c.l.bf16 %v1108
          %v1250 = vunpack.c.h.bf16 %v1108
          %v1251 = vunpack.c.l.bf16 %v1109
          %v1252 = vunpack.c.h.bf16 %v1109
          %v1253 = vunpack.c.l.bf16 %v1110
          %v1254 = vunpack.c.h.bf16 %v1110
          %v1255 = vunpack.c.l.bf16 %v1111
          %v1256 = vunpack.c.h.bf16 %v1111
          %v1257 = vunpack.c.l.bf16 %v1112
          %v1258 = vunpack.c.h.bf16 %v1112
          %v1259 = vunpack.c.l.bf16 %v1113
          %v1260 = vunpack.c.h.bf16 %v1113
          %v1261 = vunpack.c.l.bf16 %v1114
          %v1262 = vunpack.c.h.bf16 %v1114
          %v1263 = vunpack.c.l.bf16 %v1115
          %v1264 = vunpack.c.h.bf16 %v1115
          %v1265 = vunpack.c.l.bf16 %v1116
          %v1266 = vunpack.c.h.bf16 %v1116
          %v1267 = vunpack.c.l.bf16 %v1117
          %v1268 = vunpack.c.h.bf16 %v1117
          %v1269 = vunpack.c.l.bf16 %v1118
          %v1270 = vunpack.c.h.bf16 %v1118
          %v1271 = vunpack.c.l.bf16 %v1119
          %v1272 = vunpack.c.h.bf16 %v1119
          %v1273 = vunpack.c.l.bf16 %v1120
          %v1274 = vunpack.c.h.bf16 %v1120
          %v1275 = vunpack.c.l.bf16 %v1121
          %v1276 = vunpack.c.h.bf16 %v1121
          %v1277 = vunpack.c.l.bf16 %v1122
          %v1278 = vunpack.c.h.bf16 %v1122
          %v1279 = vunpack.c.l.bf16 %v1123
          %v1280 = vunpack.c.h.bf16 %v1123
          %v1281 = vunpack.c.l.bf16 %v1124
          %v1282 = vunpack.c.h.bf16 %v1124
          %v1283 = vunpack.c.l.bf16 %v1125
          %v1284 = vunpack.c.h.bf16 %v1125
          %v1285 = vunpack.c.l.bf16 %v1126
          %v1286 = vunpack.c.h.bf16 %v1126
          %v1287 = vunpack.c.l.bf16 %v1127
          %v1288 = vunpack.c.h.bf16 %v1127
          %v1289 = vunpack.c.l.bf16 %v1128
          %v1290 = vunpack.c.h.bf16 %v1128
          %v1291 = vunpack.c.l.bf16 %v1129
          %v1292 = vunpack.c.h.bf16 %v1129
          %v1293 = vunpack.c.l.bf16 %v1130
          %v1294 = vunpack.c.h.bf16 %v1130
          %v1295 = vunpack.c.l.bf16 %v1131
          %v1296 = vunpack.c.h.bf16 %v1131
          %v1297 = vunpack.c.l.bf16 %v1132
          %v1298 = vunpack.c.h.bf16 %v1132
          %v1299 = vunpack.c.l.bf16 %v1133
          %v1300 = vunpack.c.h.bf16 %v1133
          %v1301 = vunpack.c.l.bf16 %v1134
          %v1302 = vunpack.c.h.bf16 %v1134
          %v1303 = vunpack.c.l.bf16 %v1135
          %v1304 = vunpack.c.h.bf16 %v1135
          %v1305 = vunpack.c.l.bf16 %v1136
          %v1306 = vunpack.c.h.bf16 %v1136
          %v1307 = vunpack.c.l.bf16 %v1137
          %v1308 = vunpack.c.h.bf16 %v1137
          %v1309 = vunpack.c.l.bf16 %v1138
          %v1310 = vunpack.c.h.bf16 %v1138
          %v1311 = vunpack.c.l.bf16 %v1139
          %v1312 = vunpack.c.h.bf16 %v1139
          %v1313 = vunpack.c.l.bf16 %v1140
          %v1314 = vunpack.c.h.bf16 %v1140
          %v1315 = vunpack.c.l.bf16 %v1141
          %v1316 = vunpack.c.h.bf16 %v1141
          %v1317 = vunpack.c.l.bf16 %v1142
          %v1318 = vunpack.c.h.bf16 %v1142
          %v1319 = vunpack.c.l.bf16 %v1143
          %v1320 = vunpack.c.h.bf16 %v1143
          %v1321 = vunpack.c.l.bf16 %v1144
          %v1322 = vunpack.c.h.bf16 %v1144
          %v1323 = vunpack.c.l.bf16 %v1145
          %v1324 = vunpack.c.h.bf16 %v1145
          %v1325 = vunpack.c.l.bf16 %v1146
          %v1326 = vunpack.c.h.bf16 %v1146
          %v1327 = vunpack.c.l.bf16 %v1147
          %v1328 = vunpack.c.h.bf16 %v1147
          %v1329 = vunpack.c.l.bf16 %v1148
          %v1330 = vunpack.c.h.bf16 %v1148
          %v1331 = vunpack.c.l.bf16 %v1149
          %v1332 = vunpack.c.h.bf16 %v1149
          %v1333 = vunpack.c.l.bf16 %v1150
          %v1334 = vunpack.c.h.bf16 %v1150
          %v1335 = vunpack.c.l.bf16 %v1151
          %v1336 = vunpack.c.h.bf16 %v1151
          %v1337 = vunpack.c.l.bf16 %v1152
          %v1338 = vunpack.c.h.bf16 %v1152
          %v1339 = vunpack.c.l.bf16 %v1153
          %v1340 = vunpack.c.h.bf16 %v1153
          %v1341 = vunpack.c.l.bf16 %v1154
          %v1342 = vunpack.c.h.bf16 %v1154
          %v1343 = vunpack.c.l.bf16 %v1155
          %v1344 = vunpack.c.h.bf16 %v1155
          %v1345 = vunpack.c.l.bf16 %v1156
          %v1346 = vunpack.c.h.bf16 %v1156
          %v1347 = vunpack.c.l.bf16 %v1157
          %v1348 = vunpack.c.h.bf16 %v1157
          %v1349 = vunpack.c.l.bf16 %v1158
          %v1350 = vunpack.c.h.bf16 %v1158
          %v1351 = vunpack.c.l.bf16 %v1159
          %v1352 = vunpack.c.h.bf16 %v1159
          %v1353 = vunpack.c.l.bf16 %v1160
          %v1354 = vunpack.c.h.bf16 %v1160
          %v1355 = vunpack.c.l.bf16 %v1161
          %v1356 = vunpack.c.h.bf16 %v1161
          %v1357 = vunpack.c.l.bf16 %v1162
          %v1358 = vunpack.c.h.bf16 %v1162
          %v1359 = vunpack.c.l.bf16 %v1163
          %v1360 = vunpack.c.h.bf16 %v1163
          %v1361 = vunpack.c.l.bf16 %v1164
          %v1362 = vunpack.c.h.bf16 %v1164
          %v1363 = vunpack.c.l.bf16 %v1165
          %v1364 = vunpack.c.h.bf16 %v1165
          %v1365 = vunpack.c.l.bf16 %v1166
          %v1366 = vunpack.c.h.bf16 %v1166
          %v1367 = vunpack.c.l.bf16 %v1167
          %v1368 = vunpack.c.h.bf16 %v1167
          %v1369 = vunpack.c.l.bf16 %v1168
          %v1370 = vunpack.c.h.bf16 %v1168
          %v1371 = vunpack.c.l.bf16 %v1169
          %v1372 = vunpack.c.h.bf16 %v1169
          %v1373 = vunpack.c.l.bf16 %v1170
          %v1374 = vunpack.c.h.bf16 %v1170
          %v1375 = vunpack.c.l.bf16 %v1171
          %v1376 = vunpack.c.h.bf16 %v1171
          %v1377 = vunpack.c.l.bf16 %v1172
          %v1378 = vunpack.c.h.bf16 %v1172
          %v1379 = vunpack.c.l.bf16 %v1173
          %v1380 = vunpack.c.h.bf16 %v1173
          %v1381 = vunpack.c.l.bf16 %v1174
          %v1382 = vunpack.c.h.bf16 %v1174
          %v1383 = vunpack.c.l.bf16 %v1175
          %v1384 = vunpack.c.h.bf16 %v1175
          %v1385 = vunpack.c.l.bf16 %v1176
          %v1386 = vunpack.c.h.bf16 %v1176
          %v1387 = vunpack.c.l.bf16 %v1177
          %v1388 = vunpack.c.h.bf16 %v1177
          %v1389 = vunpack.c.l.bf16 %v1178
          %v1390 = vunpack.c.h.bf16 %v1178
          %v1391 = vunpack.c.l.bf16 %v1179
          %v1392 = vunpack.c.h.bf16 %v1179
          %v1393 = vunpack.c.l.bf16 %v1180
          %v1394 = vunpack.c.h.bf16 %v1180
          %v1395 = vunpack.c.l.bf16 %v1181
          %v1396 = vunpack.c.h.bf16 %v1181
          %v1397 = vunpack.c.l.bf16 %v1182
          %v1398 = vunpack.c.h.bf16 %v1182
          %v1399 = vunpack.c.l.bf16 %v1183
          %v1400 = vunpack.c.h.bf16 %v1183
          %v1401 = vunpack.c.l.bf16 %v1184
          %v1402 = vunpack.c.h.bf16 %v1184
          %v1403 = vunpack.c.l.bf16 %v1185
          %v1404 = vunpack.c.h.bf16 %v1185
          %v1405 = vunpack.c.l.bf16 %v1186
          %v1406 = vunpack.c.h.bf16 %v1186
          %v1407 = vunpack.c.l.bf16 %v1187
          %v1408 = vunpack.c.h.bf16 %v1187
          %v1409 = vunpack.c.l.bf16 %v1188
          %v1410 = vunpack.c.h.bf16 %v1188
          %v1411 = vunpack.c.l.bf16 %v1189
          %v1412 = vunpack.c.h.bf16 %v1189
          %v1413 = vunpack.c.l.bf16 %v1190
          %v1414 = vunpack.c.h.bf16 %v1190
          %v1415 = vunpack.c.l.bf16 %v1191
          %v1416 = vunpack.c.h.bf16 %v1191
          %v1417 = vunpack.c.l.bf16 %v1192
          %v1418 = vunpack.c.h.bf16 %v1192
          %v1419 = vunpack.c.l.bf16 %v1193
          %v1420 = vunpack.c.h.bf16 %v1193
          %v1421 = vunpack.c.l.bf16 %v1194
          %v1422 = vunpack.c.h.bf16 %v1194
          %v1423 = vunpack.c.l.bf16 %v1195
          %v1424 = vunpack.c.h.bf16 %v1195
          %v1425 = vunpack.c.l.bf16 %v1196
          %v1426 = vunpack.c.h.bf16 %v1196
          %v1427 = vunpack.c.l.bf16 %v1197
          %v1428 = vunpack.c.h.bf16 %v1197
          %v1429 = vunpack.c.l.bf16 %v1198
          %v1430 = vunpack.c.h.bf16 %v1198
          %v1431 = vunpack.c.l.bf16 %v1199
          %v1432 = vunpack.c.h.bf16 %v1199
          %v1433 = vunpack.c.l.bf16 %v1200
          %v1434 = vunpack.c.h.bf16 %v1200
          %v1435 = vunpack.c.l.bf16 %v1201
          %v1436 = vunpack.c.h.bf16 %v1201
          %v1437 = vunpack.c.l.bf16 %v1202
          %v1438 = vunpack.c.h.bf16 %v1202
          %v1439 = vunpack.c.l.bf16 %v1203
          %v1440 = vunpack.c.h.bf16 %v1203
          %v1441 = vunpack.c.l.bf16 %v1204
          %v1442 = vunpack.c.h.bf16 %v1204
          %v1443 = vunpack.c.l.bf16 %v1205
          %v1444 = vunpack.c.h.bf16 %v1205
          %v1445 = vunpack.c.l.bf16 %v1206
          %v1446 = vunpack.c.h.bf16 %v1206
          %v1447 = vunpack.c.l.bf16 %v1207
          %v1448 = vunpack.c.h.bf16 %v1207
          %v1449 = vunpack.c.l.bf16 %v1208
          %v1450 = vunpack.c.h.bf16 %v1208
          %v1451 = vunpack.c.l.bf16 %v1209
          %v1452 = vunpack.c.h.bf16 %v1209
          %v1453 = vunpack.c.l.bf16 %v1210
          %v1454 = vunpack.c.h.bf16 %v1210
          %v1455 = vunpack.c.l.bf16 %v1211
          %v1456 = vunpack.c.h.bf16 %v1211
          %v1457 = vunpack.c.l.bf16 %v1212
          %v1458 = vunpack.c.h.bf16 %v1212
          %v1459 = vunpack.c.l.bf16 %v1213
          %v1460 = vunpack.c.h.bf16 %v1213
          %v1461 = vunpack.c.l.bf16 %v1214
          %v1462 = vunpack.c.h.bf16 %v1214
          %v1463 = vunpack.c.l.bf16 %v1215
          %v1464 = vunpack.c.h.bf16 %v1215
          %v1465 = vunpack.c.l.bf16 %v1216
          %v1466 = vunpack.c.h.bf16 %v1216
          %v1467 = vunpack.c.l.bf16 %v1217
          %v1468 = vunpack.c.h.bf16 %v1217
          %v1469 = vunpack.c.l.bf16 %v1218
          %v1470 = vunpack.c.h.bf16 %v1218
          %v1471 = vunpack.c.l.bf16 %v1219
          %v1472 = vunpack.c.h.bf16 %v1219
          %v1473 = vunpack.c.l.bf16 %v1220
          %v1474 = vunpack.c.h.bf16 %v1220
          %v1475 = vunpack.c.l.bf16 %v1221
          %v1476 = vunpack.c.h.bf16 %v1221
          %v1477 = vunpack.c.l.bf16 %v1222
          %v1478 = vunpack.c.h.bf16 %v1222
          %s1479 = smul.u32 %s28, 128
          %v1480 = vlaneseq
          %v1481 = vshrl.u32 %v1480, 7
          %v1482 = vadd.s32 %v1481, 8
          %v1483 = vadd.s32 %v1481, 16
          %v1484 = vadd.s32 %v1481, 24
          %v1485 = vadd.s32 %v1481, 32
          %v1486 = vadd.s32 %v1481, 40
          %v1487 = vadd.s32 %v1481, 48
          %v1488 = vadd.s32 %v1481, 56
          %v1489 = vadd.s32 %v1481, 64
          %v1490 = vadd.s32 %v1481, 72
          %v1491 = vadd.s32 %v1481, 80
          %v1492 = vadd.s32 %v1481, 88
          %v1493 = vadd.s32 %v1481, 96
          %v1494 = vadd.s32 %v1481, 104
          %v1495 = vadd.s32 %v1481, 112
          %v1496 = vadd.s32 %v1481, 120
          %v1497 = vstv %s1479
          %v1498 = vadd.s32 %v1497, %v1481
          %v1499 = vadd.s32 %v1497, %v1482
          %v1500 = vadd.s32 %v1497, %v1483
          %v1501 = vadd.s32 %v1497, %v1484
          %v1502 = vadd.s32 %v1497, %v1485
          %v1503 = vadd.s32 %v1497, %v1486
          %v1504 = vadd.s32 %v1497, %v1487
          %v1505 = vadd.s32 %v1497, %v1488
          %v1506 = vadd.s32 %v1497, %v1489
          %v1507 = vadd.s32 %v1497, %v1490
          %v1508 = vadd.s32 %v1497, %v1491
          %v1509 = vadd.s32 %v1497, %v1492
          %v1510 = vadd.s32 %v1497, %v1493
          %v1511 = vadd.s32 %v1497, %v1494
          %v1512 = vadd.s32 %v1497, %v1495
          %v1513 = vadd.s32 %v1497, %v1496
          %vm1514 = vcmp.lt.s32.totalorder %v1498, 192
          %vm1515 = vcmp.lt.s32.totalorder %v1499, 192
          %vm1516 = vcmp.lt.s32.totalorder %v1500, 192
          %vm1517 = vcmp.lt.s32.totalorder %v1501, 192
          %vm1518 = vcmp.lt.s32.totalorder %v1502, 192
          %vm1519 = vcmp.lt.s32.totalorder %v1503, 192
          %vm1520 = vcmp.lt.s32.totalorder %v1504, 192
          %vm1521 = vcmp.lt.s32.totalorder %v1505, 192
          %vm1522 = vcmp.lt.s32.totalorder %v1506, 192
          %vm1523 = vcmp.lt.s32.totalorder %v1507, 192
          %vm1524 = vcmp.lt.s32.totalorder %v1508, 192
          %vm1525 = vcmp.lt.s32.totalorder %v1509, 192
          %vm1526 = vcmp.lt.s32.totalorder %v1510, 192
          %vm1527 = vcmp.lt.s32.totalorder %v1511, 192
          %vm1528 = vcmp.lt.s32.totalorder %v1512, 192
          %vm1529 = vcmp.lt.s32.totalorder %v1513, 192
          %v1530 = vsel %vm1514, 1, 0
          %v1531 = vsel %vm1515, 1, 0
          %v1532 = vsel %vm1516, 1, 0
          %v1533 = vsel %vm1517, 1, 0
          %v1534 = vsel %vm1518, 1, 0
          %v1535 = vsel %vm1519, 1, 0
          %v1536 = vsel %vm1520, 1, 0
          %v1537 = vsel %vm1521, 1, 0
          %v1538 = vsel %vm1522, 1, 0
          %v1539 = vsel %vm1523, 1, 0
          %v1540 = vsel %vm1524, 1, 0
          %v1541 = vsel %vm1525, 1, 0
          %v1542 = vsel %vm1526, 1, 0
          %v1543 = vsel %vm1527, 1, 0
          %v1544 = vsel %vm1528, 1, 0
          %v1545 = vsel %vm1529, 1, 0
          %vm1546 = vcmp.eq.s32.totalorder %v1530, 1
          %vm1547 = vcmp.eq.s32.totalorder %v1531, 1
          %vm1548 = vcmp.eq.s32.totalorder %v1532, 1
          %vm1549 = vcmp.eq.s32.totalorder %v1533, 1
          %vm1550 = vcmp.eq.s32.totalorder %v1534, 1
          %vm1551 = vcmp.eq.s32.totalorder %v1535, 1
          %vm1552 = vcmp.eq.s32.totalorder %v1536, 1
          %vm1553 = vcmp.eq.s32.totalorder %v1537, 1
          %vm1554 = vcmp.eq.s32.totalorder %v1538, 1
          %vm1555 = vcmp.eq.s32.totalorder %v1539, 1
          %vm1556 = vcmp.eq.s32.totalorder %v1540, 1
          %vm1557 = vcmp.eq.s32.totalorder %v1541, 1
          %vm1558 = vcmp.eq.s32.totalorder %v1542, 1
          %vm1559 = vcmp.eq.s32.totalorder %v1543, 1
          %vm1560 = vcmp.eq.s32.totalorder %v1544, 1
          %vm1561 = vcmp.eq.s32.totalorder %v1545, 1
          %v1562 = vsel %vm1546, %v1223, 0.0
          %v1563 = vsel %vm1546, %v1224, 0.0
          %v1564 = vsel %vm1547, %v1225, 0.0
          %v1565 = vsel %vm1547, %v1226, 0.0
          %v1566 = vsel %vm1548, %v1227, 0.0
          %v1567 = vsel %vm1548, %v1228, 0.0
          %v1568 = vsel %vm1549, %v1229, 0.0
          %v1569 = vsel %vm1549, %v1230, 0.0
          %v1570 = vsel %vm1550, %v1231, 0.0
          %v1571 = vsel %vm1550, %v1232, 0.0
          %v1572 = vsel %vm1551, %v1233, 0.0
          %v1573 = vsel %vm1551, %v1234, 0.0
          %v1574 = vsel %vm1552, %v1235, 0.0
          %v1575 = vsel %vm1552, %v1236, 0.0
          %v1576 = vsel %vm1553, %v1237, 0.0
          %v1577 = vsel %vm1553, %v1238, 0.0
          %v1578 = vsel %vm1554, %v1239, 0.0
          %v1579 = vsel %vm1554, %v1240, 0.0
          %v1580 = vsel %vm1555, %v1241, 0.0
          %v1581 = vsel %vm1555, %v1242, 0.0
          %v1582 = vsel %vm1556, %v1243, 0.0
          %v1583 = vsel %vm1556, %v1244, 0.0
          %v1584 = vsel %vm1557, %v1245, 0.0
          %v1585 = vsel %vm1557, %v1246, 0.0
          %v1586 = vsel %vm1558, %v1247, 0.0
          %v1587 = vsel %vm1558, %v1248, 0.0
          %v1588 = vsel %vm1559, %v1249, 0.0
          %v1589 = vsel %vm1559, %v1250, 0.0
          %v1590 = vsel %vm1560, %v1251, 0.0
          %v1591 = vsel %vm1560, %v1252, 0.0
          %v1592 = vsel %vm1561, %v1253, 0.0
          %v1593 = vsel %vm1561, %v1254, 0.0
          %v1594 = vsel %vm1546, %v1255, 0.0
          %v1595 = vsel %vm1546, %v1256, 0.0
          %v1596 = vsel %vm1547, %v1257, 0.0
          %v1597 = vsel %vm1547, %v1258, 0.0
          %v1598 = vsel %vm1548, %v1259, 0.0
          %v1599 = vsel %vm1548, %v1260, 0.0
          %v1600 = vsel %vm1549, %v1261, 0.0
          %v1601 = vsel %vm1549, %v1262, 0.0
          %v1602 = vsel %vm1550, %v1263, 0.0
          %v1603 = vsel %vm1550, %v1264, 0.0
          %v1604 = vsel %vm1551, %v1265, 0.0
          %v1605 = vsel %vm1551, %v1266, 0.0
          %v1606 = vsel %vm1552, %v1267, 0.0
          %v1607 = vsel %vm1552, %v1268, 0.0
          %v1608 = vsel %vm1553, %v1269, 0.0
          %v1609 = vsel %vm1553, %v1270, 0.0
          %v1610 = vsel %vm1554, %v1271, 0.0
          %v1611 = vsel %vm1554, %v1272, 0.0
          %v1612 = vsel %vm1555, %v1273, 0.0
          %v1613 = vsel %vm1555, %v1274, 0.0
          %v1614 = vsel %vm1556, %v1275, 0.0
          %v1615 = vsel %vm1556, %v1276, 0.0
          %v1616 = vsel %vm1557, %v1277, 0.0
          %v1617 = vsel %vm1557, %v1278, 0.0
          %v1618 = vsel %vm1558, %v1279, 0.0
          %v1619 = vsel %vm1558, %v1280, 0.0
          %v1620 = vsel %vm1559, %v1281, 0.0
          %v1621 = vsel %vm1559, %v1282, 0.0
          %v1622 = vsel %vm1560, %v1283, 0.0
          %v1623 = vsel %vm1560, %v1284, 0.0
          %v1624 = vsel %vm1561, %v1285, 0.0
          %v1625 = vsel %vm1561, %v1286, 0.0
          %v1626 = vsel %vm1546, %v1287, 0.0
          %v1627 = vsel %vm1546, %v1288, 0.0
          %v1628 = vsel %vm1547, %v1289, 0.0
          %v1629 = vsel %vm1547, %v1290, 0.0
          %v1630 = vsel %vm1548, %v1291, 0.0
          %v1631 = vsel %vm1548, %v1292, 0.0
          %v1632 = vsel %vm1549, %v1293, 0.0
          %v1633 = vsel %vm1549, %v1294, 0.0
          %v1634 = vsel %vm1550, %v1295, 0.0
          %v1635 = vsel %vm1550, %v1296, 0.0
          %v1636 = vsel %vm1551, %v1297, 0.0
          %v1637 = vsel %vm1551, %v1298, 0.0
          %v1638 = vsel %vm1552, %v1299, 0.0
          %v1639 = vsel %vm1552, %v1300, 0.0
          %v1640 = vsel %vm1553, %v1301, 0.0
          %v1641 = vsel %vm1553, %v1302, 0.0
          %v1642 = vsel %vm1554, %v1303, 0.0
          %v1643 = vsel %vm1554, %v1304, 0.0
          %v1644 = vsel %vm1555, %v1305, 0.0
          %v1645 = vsel %vm1555, %v1306, 0.0
          %v1646 = vsel %vm1556, %v1307, 0.0
          %v1647 = vsel %vm1556, %v1308, 0.0
          %v1648 = vsel %vm1557, %v1309, 0.0
          %v1649 = vsel %vm1557, %v1310, 0.0
          %v1650 = vsel %vm1558, %v1311, 0.0
          %v1651 = vsel %vm1558, %v1312, 0.0
          %v1652 = vsel %vm1559, %v1313, 0.0
          %v1653 = vsel %vm1559, %v1314, 0.0
          %v1654 = vsel %vm1560, %v1315, 0.0
          %v1655 = vsel %vm1560, %v1316, 0.0
          %v1656 = vsel %vm1561, %v1317, 0.0
          %v1657 = vsel %vm1561, %v1318, 0.0
          %v1658 = vsel %vm1546, %v1319, 0.0
          %v1659 = vsel %vm1546, %v1320, 0.0
          %v1660 = vsel %vm1547, %v1321, 0.0
          %v1661 = vsel %vm1547, %v1322, 0.0
          %v1662 = vsel %vm1548, %v1323, 0.0
          %v1663 = vsel %vm1548, %v1324, 0.0
          %v1664 = vsel %vm1549, %v1325, 0.0
          %v1665 = vsel %vm1549, %v1326, 0.0
          %v1666 = vsel %vm1550, %v1327, 0.0
          %v1667 = vsel %vm1550, %v1328, 0.0
          %v1668 = vsel %vm1551, %v1329, 0.0
          %v1669 = vsel %vm1551, %v1330, 0.0
          %v1670 = vsel %vm1552, %v1331, 0.0
          %v1671 = vsel %vm1552, %v1332, 0.0
          %v1672 = vsel %vm1553, %v1333, 0.0
          %v1673 = vsel %vm1553, %v1334, 0.0
          %v1674 = vsel %vm1554, %v1335, 0.0
          %v1675 = vsel %vm1554, %v1336, 0.0
          %v1676 = vsel %vm1555, %v1337, 0.0
          %v1677 = vsel %vm1555, %v1338, 0.0
          %v1678 = vsel %vm1556, %v1339, 0.0
          %v1679 = vsel %vm1556, %v1340, 0.0
          %v1680 = vsel %vm1557, %v1341, 0.0
          %v1681 = vsel %vm1557, %v1342, 0.0
          %v1682 = vsel %vm1558, %v1343, 0.0
          %v1683 = vsel %vm1558, %v1344, 0.0
          %v1684 = vsel %vm1559, %v1345, 0.0
          %v1685 = vsel %vm1559, %v1346, 0.0
          %v1686 = vsel %vm1560, %v1347, 0.0
          %v1687 = vsel %vm1560, %v1348, 0.0
          %v1688 = vsel %vm1561, %v1349, 0.0
          %v1689 = vsel %vm1561, %v1350, 0.0
          %v1690 = vsel %vm1546, %v1351, 0.0
          %v1691 = vsel %vm1546, %v1352, 0.0
          %v1692 = vsel %vm1547, %v1353, 0.0
          %v1693 = vsel %vm1547, %v1354, 0.0
          %v1694 = vsel %vm1548, %v1355, 0.0
          %v1695 = vsel %vm1548, %v1356, 0.0
          %v1696 = vsel %vm1549, %v1357, 0.0
          %v1697 = vsel %vm1549, %v1358, 0.0
          %v1698 = vsel %vm1550, %v1359, 0.0
          %v1699 = vsel %vm1550, %v1360, 0.0
          %v1700 = vsel %vm1551, %v1361, 0.0
          %v1701 = vsel %vm1551, %v1362, 0.0
          %v1702 = vsel %vm1552, %v1363, 0.0
          %v1703 = vsel %vm1552, %v1364, 0.0
          %v1704 = vsel %vm1553, %v1365, 0.0
          %v1705 = vsel %vm1553, %v1366, 0.0
          %v1706 = vsel %vm1554, %v1367, 0.0
          %v1707 = vsel %vm1554, %v1368, 0.0
          %v1708 = vsel %vm1555, %v1369, 0.0
          %v1709 = vsel %vm1555, %v1370, 0.0
          %v1710 = vsel %vm1556, %v1371, 0.0
          %v1711 = vsel %vm1556, %v1372, 0.0
          %v1712 = vsel %vm1557, %v1373, 0.0
          %v1713 = vsel %vm1557, %v1374, 0.0
          %v1714 = vsel %vm1558, %v1375, 0.0
          %v1715 = vsel %vm1558, %v1376, 0.0
          %v1716 = vsel %vm1559, %v1377, 0.0
          %v1717 = vsel %vm1559, %v1378, 0.0
          %v1718 = vsel %vm1560, %v1379, 0.0
          %v1719 = vsel %vm1560, %v1380, 0.0
          %v1720 = vsel %vm1561, %v1381, 0.0
          %v1721 = vsel %vm1561, %v1382, 0.0
          %v1722 = vsel %vm1546, %v1383, 0.0
          %v1723 = vsel %vm1546, %v1384, 0.0
          %v1724 = vsel %vm1547, %v1385, 0.0
          %v1725 = vsel %vm1547, %v1386, 0.0
          %v1726 = vsel %vm1548, %v1387, 0.0
          %v1727 = vsel %vm1548, %v1388, 0.0
          %v1728 = vsel %vm1549, %v1389, 0.0
          %v1729 = vsel %vm1549, %v1390, 0.0
          %v1730 = vsel %vm1550, %v1391, 0.0
          %v1731 = vsel %vm1550, %v1392, 0.0
          %v1732 = vsel %vm1551, %v1393, 0.0
          %v1733 = vsel %vm1551, %v1394, 0.0
          %v1734 = vsel %vm1552, %v1395, 0.0
          %v1735 = vsel %vm1552, %v1396, 0.0
          %v1736 = vsel %vm1553, %v1397, 0.0
          %v1737 = vsel %vm1553, %v1398, 0.0
          %v1738 = vsel %vm1554, %v1399, 0.0
          %v1739 = vsel %vm1554, %v1400, 0.0
          %v1740 = vsel %vm1555, %v1401, 0.0
          %v1741 = vsel %vm1555, %v1402, 0.0
          %v1742 = vsel %vm1556, %v1403, 0.0
          %v1743 = vsel %vm1556, %v1404, 0.0
          %v1744 = vsel %vm1557, %v1405, 0.0
          %v1745 = vsel %vm1557, %v1406, 0.0
          %v1746 = vsel %vm1558, %v1407, 0.0
          %v1747 = vsel %vm1558, %v1408, 0.0
          %v1748 = vsel %vm1559, %v1409, 0.0
          %v1749 = vsel %vm1559, %v1410, 0.0
          %v1750 = vsel %vm1560, %v1411, 0.0
          %v1751 = vsel %vm1560, %v1412, 0.0
          %v1752 = vsel %vm1561, %v1413, 0.0
          %v1753 = vsel %vm1561, %v1414, 0.0
          %v1754 = vsel %vm1546, %v1415, 0.0
          %v1755 = vsel %vm1546, %v1416, 0.0
          %v1756 = vsel %vm1547, %v1417, 0.0
          %v1757 = vsel %vm1547, %v1418, 0.0
          %v1758 = vsel %vm1548, %v1419, 0.0
          %v1759 = vsel %vm1548, %v1420, 0.0
          %v1760 = vsel %vm1549, %v1421, 0.0
          %v1761 = vsel %vm1549, %v1422, 0.0
          %v1762 = vsel %vm1550, %v1423, 0.0
          %v1763 = vsel %vm1550, %v1424, 0.0
          %v1764 = vsel %vm1551, %v1425, 0.0
          %v1765 = vsel %vm1551, %v1426, 0.0
          %v1766 = vsel %vm1552, %v1427, 0.0
          %v1767 = vsel %vm1552, %v1428, 0.0
          %v1768 = vsel %vm1553, %v1429, 0.0
          %v1769 = vsel %vm1553, %v1430, 0.0
          %v1770 = vsel %vm1554, %v1431, 0.0
          %v1771 = vsel %vm1554, %v1432, 0.0
          %v1772 = vsel %vm1555, %v1433, 0.0
          %v1773 = vsel %vm1555, %v1434, 0.0
          %v1774 = vsel %vm1556, %v1435, 0.0
          %v1775 = vsel %vm1556, %v1436, 0.0
          %v1776 = vsel %vm1557, %v1437, 0.0
          %v1777 = vsel %vm1557, %v1438, 0.0
          %v1778 = vsel %vm1558, %v1439, 0.0
          %v1779 = vsel %vm1558, %v1440, 0.0
          %v1780 = vsel %vm1559, %v1441, 0.0
          %v1781 = vsel %vm1559, %v1442, 0.0
          %v1782 = vsel %vm1560, %v1443, 0.0
          %v1783 = vsel %vm1560, %v1444, 0.0
          %v1784 = vsel %vm1561, %v1445, 0.0
          %v1785 = vsel %vm1561, %v1446, 0.0
          %v1786 = vsel %vm1546, %v1447, 0.0
          %v1787 = vsel %vm1546, %v1448, 0.0
          %v1788 = vsel %vm1547, %v1449, 0.0
          %v1789 = vsel %vm1547, %v1450, 0.0
          %v1790 = vsel %vm1548, %v1451, 0.0
          %v1791 = vsel %vm1548, %v1452, 0.0
          %v1792 = vsel %vm1549, %v1453, 0.0
          %v1793 = vsel %vm1549, %v1454, 0.0
          %v1794 = vsel %vm1550, %v1455, 0.0
          %v1795 = vsel %vm1550, %v1456, 0.0
          %v1796 = vsel %vm1551, %v1457, 0.0
          %v1797 = vsel %vm1551, %v1458, 0.0
          %v1798 = vsel %vm1552, %v1459, 0.0
          %v1799 = vsel %vm1552, %v1460, 0.0
          %v1800 = vsel %vm1553, %v1461, 0.0
          %v1801 = vsel %vm1553, %v1462, 0.0
          %v1802 = vsel %vm1554, %v1463, 0.0
          %v1803 = vsel %vm1554, %v1464, 0.0
          %v1804 = vsel %vm1555, %v1465, 0.0
          %v1805 = vsel %vm1555, %v1466, 0.0
          %v1806 = vsel %vm1556, %v1467, 0.0
          %v1807 = vsel %vm1556, %v1468, 0.0
          %v1808 = vsel %vm1557, %v1469, 0.0
          %v1809 = vsel %vm1557, %v1470, 0.0
          %v1810 = vsel %vm1558, %v1471, 0.0
          %v1811 = vsel %vm1558, %v1472, 0.0
          %v1812 = vsel %vm1559, %v1473, 0.0
          %v1813 = vsel %vm1559, %v1474, 0.0
          %v1814 = vsel %vm1560, %v1475, 0.0
          %v1815 = vsel %vm1560, %v1476, 0.0
          %v1816 = vsel %vm1561, %v1477, 0.0
          %v1817 = vsel %vm1561, %v1478, 0.0
          %v1818 = vld [vmem:[#allocation2] sm:$0xff]
          %v1819 = vld [vmem:[#allocation2 + $0x8] sm:$0xff]
          %v1820 = vadd.f32 %v1562, %v1564
          %v1821 = vadd.f32 %v1820, %v1566
          %v1822 = vadd.f32 %v1821, %v1568
          %v1823 = vadd.f32 %v1822, %v1570
          %v1824 = vadd.f32 %v1823, %v1572
          %v1825 = vadd.f32 %v1824, %v1574
          %v1826 = vadd.f32 %v1825, %v1576
          %v1827 = vadd.f32 %v1826, %v1578
          %v1828 = vadd.f32 %v1827, %v1580
          %v1829 = vadd.f32 %v1828, %v1582
          %v1830 = vadd.f32 %v1829, %v1584
          %v1831 = vadd.f32 %v1830, %v1586
          %v1832 = vadd.f32 %v1831, %v1588
          %v1833 = vadd.f32 %v1832, %v1590
          %v1834 = vadd.f32 %v1833, %v1592
          %v1835 = vrot.slane %v1834, 4
          %v1836 = vadd.f32 %v1834, %v1835
          %v1837 = vrot.slane %v1836, 2
          %v1838 = vadd.f32 %v1836, %v1837
          %v1839 = vrot.slane %v1838, 1
          %v1840 = vadd.f32 %v1838, %v1839
          %v1841 = vadd.f32 %v1563, %v1565
          %v1842 = vadd.f32 %v1841, %v1567
          %v1843 = vadd.f32 %v1842, %v1569
          %v1844 = vadd.f32 %v1843, %v1571
          %v1845 = vadd.f32 %v1844, %v1573
          %v1846 = vadd.f32 %v1845, %v1575
          %v1847 = vadd.f32 %v1846, %v1577
          %v1848 = vadd.f32 %v1847, %v1579
          %v1849 = vadd.f32 %v1848, %v1581
          %v1850 = vadd.f32 %v1849, %v1583
          %v1851 = vadd.f32 %v1850, %v1585
          %v1852 = vadd.f32 %v1851, %v1587
          %v1853 = vadd.f32 %v1852, %v1589
          %v1854 = vadd.f32 %v1853, %v1591
          %v1855 = vadd.f32 %v1854, %v1593
          %v1856 = vrot.slane %v1855, 4
          %v1857 = vadd.f32 %v1855, %v1856
          %v1858 = vrot.slane %v1857, 2
          %v1859 = vadd.f32 %v1857, %v1858
          %v1860 = vrot.slane %v1859, 1
          %v1861 = vadd.f32 %v1859, %v1860
          %v1862 = vadd.f32 %v1594, %v1596
          %v1863 = vadd.f32 %v1862, %v1598
          %v1864 = vadd.f32 %v1863, %v1600
          %v1865 = vadd.f32 %v1864, %v1602
          %v1866 = vadd.f32 %v1865, %v1604
          %v1867 = vadd.f32 %v1866, %v1606
          %v1868 = vadd.f32 %v1867, %v1608
          %v1869 = vadd.f32 %v1868, %v1610
          %v1870 = vadd.f32 %v1869, %v1612
          %v1871 = vadd.f32 %v1870, %v1614
          %v1872 = vadd.f32 %v1871, %v1616
          %v1873 = vadd.f32 %v1872, %v1618
          %v1874 = vadd.f32 %v1873, %v1620
          %v1875 = vadd.f32 %v1874, %v1622
          %v1876 = vadd.f32 %v1875, %v1624
          %v1877 = vrot.slane %v1876, 4
          %v1878 = vadd.f32 %v1876, %v1877
          %v1879 = vrot.slane %v1878, 2
          %v1880 = vadd.f32 %v1878, %v1879
          %v1881 = vrot.slane %v1880, 1
          %v1882 = vadd.f32 %v1880, %v1881
          %v1883 = vadd.f32 %v1595, %v1597
          %v1884 = vadd.f32 %v1883, %v1599
          %v1885 = vadd.f32 %v1884, %v1601
          %v1886 = vadd.f32 %v1885, %v1603
          %v1887 = vadd.f32 %v1886, %v1605
          %v1888 = vadd.f32 %v1887, %v1607
          %v1889 = vadd.f32 %v1888, %v1609
          %v1890 = vadd.f32 %v1889, %v1611
          %v1891 = vadd.f32 %v1890, %v1613
          %v1892 = vadd.f32 %v1891, %v1615
          %v1893 = vadd.f32 %v1892, %v1617
          %v1894 = vadd.f32 %v1893, %v1619
          %v1895 = vadd.f32 %v1894, %v1621
          %v1896 = vadd.f32 %v1895, %v1623
          %v1897 = vadd.f32 %v1896, %v1625
          %v1898 = vrot.slane %v1897, 4
          %v1899 = vadd.f32 %v1897, %v1898
          %v1900 = vrot.slane %v1899, 2
          %v1901 = vadd.f32 %v1899, %v1900
          %v1902 = vrot.slane %v1901, 1
          %v1903 = vadd.f32 %v1901, %v1902
          %v1904 = vadd.f32 %v1626, %v1628
          %v1905 = vadd.f32 %v1904, %v1630
          %v1906 = vadd.f32 %v1905, %v1632
          %v1907 = vadd.f32 %v1906, %v1634
          %v1908 = vadd.f32 %v1907, %v1636
          %v1909 = vadd.f32 %v1908, %v1638
          %v1910 = vadd.f32 %v1909, %v1640
          %v1911 = vadd.f32 %v1910, %v1642
          %v1912 = vadd.f32 %v1911, %v1644
          %v1913 = vadd.f32 %v1912, %v1646
          %v1914 = vadd.f32 %v1913, %v1648
          %v1915 = vadd.f32 %v1914, %v1650
          %v1916 = vadd.f32 %v1915, %v1652
          %v1917 = vadd.f32 %v1916, %v1654
          %v1918 = vadd.f32 %v1917, %v1656
          %v1919 = vrot.slane %v1918, 4
          %v1920 = vadd.f32 %v1918, %v1919
          %v1921 = vrot.slane %v1920, 2
          %v1922 = vadd.f32 %v1920, %v1921
          %v1923 = vrot.slane %v1922, 1
          %v1924 = vadd.f32 %v1922, %v1923
          %v1925 = vadd.f32 %v1627, %v1629
          %v1926 = vadd.f32 %v1925, %v1631
          %v1927 = vadd.f32 %v1926, %v1633
          %v1928 = vadd.f32 %v1927, %v1635
          %v1929 = vadd.f32 %v1928, %v1637
          %v1930 = vadd.f32 %v1929, %v1639
          %v1931 = vadd.f32 %v1930, %v1641
          %v1932 = vadd.f32 %v1931, %v1643
          %v1933 = vadd.f32 %v1932, %v1645
          %v1934 = vadd.f32 %v1933, %v1647
          %v1935 = vadd.f32 %v1934, %v1649
          %v1936 = vadd.f32 %v1935, %v1651
          %v1937 = vadd.f32 %v1936, %v1653
          %v1938 = vadd.f32 %v1937, %v1655
          %v1939 = vadd.f32 %v1938, %v1657
          %v1940 = vrot.slane %v1939, 4
          %v1941 = vadd.f32 %v1939, %v1940
          %v1942 = vrot.slane %v1941, 2
          %v1943 = vadd.f32 %v1941, %v1942
          %v1944 = vrot.slane %v1943, 1
          %v1945 = vadd.f32 %v1943, %v1944
          %v1946 = vadd.f32 %v1658, %v1660
          %v1947 = vadd.f32 %v1946, %v1662
          %v1948 = vadd.f32 %v1947, %v1664
          %v1949 = vadd.f32 %v1948, %v1666
          %v1950 = vadd.f32 %v1949, %v1668
          %v1951 = vadd.f32 %v1950, %v1670
          %v1952 = vadd.f32 %v1951, %v1672
          %v1953 = vadd.f32 %v1952, %v1674
          %v1954 = vadd.f32 %v1953, %v1676
          %v1955 = vadd.f32 %v1954, %v1678
          %v1956 = vadd.f32 %v1955, %v1680
          %v1957 = vadd.f32 %v1956, %v1682
          %v1958 = vadd.f32 %v1957, %v1684
          %v1959 = vadd.f32 %v1958, %v1686
          %v1960 = vadd.f32 %v1959, %v1688
          %v1961 = vrot.slane %v1960, 4
          %v1962 = vadd.f32 %v1960, %v1961
          %v1963 = vrot.slane %v1962, 2
          %v1964 = vadd.f32 %v1962, %v1963
          %v1965 = vrot.slane %v1964, 1
          %v1966 = vadd.f32 %v1964, %v1965
          %v1967 = vadd.f32 %v1659, %v1661
          %v1968 = vadd.f32 %v1967, %v1663
          %v1969 = vadd.f32 %v1968, %v1665
          %v1970 = vadd.f32 %v1969, %v1667
          %v1971 = vadd.f32 %v1970, %v1669
          %v1972 = vadd.f32 %v1971, %v1671
          %v1973 = vadd.f32 %v1972, %v1673
          %v1974 = vadd.f32 %v1973, %v1675
          %v1975 = vadd.f32 %v1974, %v1677
          %v1976 = vadd.f32 %v1975, %v1679
          %v1977 = vadd.f32 %v1976, %v1681
          %v1978 = vadd.f32 %v1977, %v1683
          %v1979 = vadd.f32 %v1978, %v1685
          %v1980 = vadd.f32 %v1979, %v1687
          %v1981 = vadd.f32 %v1980, %v1689
          %v1982 = vrot.slane %v1981, 4
          %v1983 = vadd.f32 %v1981, %v1982
          %v1984 = vrot.slane %v1983, 2
          %v1985 = vadd.f32 %v1983, %v1984
          %v1986 = vrot.slane %v1985, 1
          %v1987 = vadd.f32 %v1985, %v1986
          %v1988 = vadd.f32 %v1690, %v1692
          %v1989 = vadd.f32 %v1988, %v1694
          %v1990 = vadd.f32 %v1989, %v1696
          %v1991 = vadd.f32 %v1990, %v1698
          %v1992 = vadd.f32 %v1991, %v1700
          %v1993 = vadd.f32 %v1992, %v1702
          %v1994 = vadd.f32 %v1993, %v1704
          %v1995 = vadd.f32 %v1994, %v1706
          %v1996 = vadd.f32 %v1995, %v1708
          %v1997 = vadd.f32 %v1996, %v1710
          %v1998 = vadd.f32 %v1997, %v1712
          %v1999 = vadd.f32 %v1998, %v1714
          %v2000 = vadd.f32 %v1999, %v1716
          %v2001 = vadd.f32 %v2000, %v1718
          %v2002 = vadd.f32 %v2001, %v1720
          %v2003 = vrot.slane %v2002, 4
          %v2004 = vadd.f32 %v2002, %v2003
          %v2005 = vrot.slane %v2004, 2
          %v2006 = vadd.f32 %v2004, %v2005
          %v2007 = vrot.slane %v2006, 1
          %v2008 = vadd.f32 %v2006, %v2007
          %v2009 = vadd.f32 %v1691, %v1693
          %v2010 = vadd.f32 %v2009, %v1695
          %v2011 = vadd.f32 %v2010, %v1697
          %v2012 = vadd.f32 %v2011, %v1699
          %v2013 = vadd.f32 %v2012, %v1701
          %v2014 = vadd.f32 %v2013, %v1703
          %v2015 = vadd.f32 %v2014, %v1705
          %v2016 = vadd.f32 %v2015, %v1707
          %v2017 = vadd.f32 %v2016, %v1709
          %v2018 = vadd.f32 %v2017, %v1711
          %v2019 = vadd.f32 %v2018, %v1713
          %v2020 = vadd.f32 %v2019, %v1715
          %v2021 = vadd.f32 %v2020, %v1717
          %v2022 = vadd.f32 %v2021, %v1719
          %v2023 = vadd.f32 %v2022, %v1721
          %v2024 = vrot.slane %v2023, 4
          %v2025 = vadd.f32 %v2023, %v2024
          %v2026 = vrot.slane %v2025, 2
          %v2027 = vadd.f32 %v2025, %v2026
          %v2028 = vrot.slane %v2027, 1
          %v2029 = vadd.f32 %v2027, %v2028
          %v2030 = vadd.f32 %v1722, %v1724
          %v2031 = vadd.f32 %v2030, %v1726
          %v2032 = vadd.f32 %v2031, %v1728
          %v2033 = vadd.f32 %v2032, %v1730
          %v2034 = vadd.f32 %v2033, %v1732
          %v2035 = vadd.f32 %v2034, %v1734
          %v2036 = vadd.f32 %v2035, %v1736
          %v2037 = vadd.f32 %v2036, %v1738
          %v2038 = vadd.f32 %v2037, %v1740
          %v2039 = vadd.f32 %v2038, %v1742
          %v2040 = vadd.f32 %v2039, %v1744
          %v2041 = vadd.f32 %v2040, %v1746
          %v2042 = vadd.f32 %v2041, %v1748
          %v2043 = vadd.f32 %v2042, %v1750
          %v2044 = vadd.f32 %v2043, %v1752
          %v2045 = vrot.slane %v2044, 4
          %v2046 = vadd.f32 %v2044, %v2045
          %v2047 = vrot.slane %v2046, 2
          %v2048 = vadd.f32 %v2046, %v2047
          %v2049 = vrot.slane %v2048, 1
          %v2050 = vadd.f32 %v2048, %v2049
          %v2051 = vadd.f32 %v1723, %v1725
          %v2052 = vadd.f32 %v2051, %v1727
          %v2053 = vadd.f32 %v2052, %v1729
          %v2054 = vadd.f32 %v2053, %v1731
          %v2055 = vadd.f32 %v2054, %v1733
          %v2056 = vadd.f32 %v2055, %v1735
          %v2057 = vadd.f32 %v2056, %v1737
          %v2058 = vadd.f32 %v2057, %v1739
          %v2059 = vadd.f32 %v2058, %v1741
          %v2060 = vadd.f32 %v2059, %v1743
          %v2061 = vadd.f32 %v2060, %v1745
          %v2062 = vadd.f32 %v2061, %v1747
          %v2063 = vadd.f32 %v2062, %v1749
          %v2064 = vadd.f32 %v2063, %v1751
          %v2065 = vadd.f32 %v2064, %v1753
          %v2066 = vrot.slane %v2065, 4
          %v2067 = vadd.f32 %v2065, %v2066
          %v2068 = vrot.slane %v2067, 2
          %v2069 = vadd.f32 %v2067, %v2068
          %v2070 = vrot.slane %v2069, 1
          %v2071 = vadd.f32 %v2069, %v2070
          %v2072 = vadd.f32 %v1754, %v1756
          %v2073 = vadd.f32 %v2072, %v1758
          %v2074 = vadd.f32 %v2073, %v1760
          %v2075 = vadd.f32 %v2074, %v1762
          %v2076 = vadd.f32 %v2075, %v1764
          %v2077 = vadd.f32 %v2076, %v1766
          %v2078 = vadd.f32 %v2077, %v1768
          %v2079 = vadd.f32 %v2078, %v1770
          %v2080 = vadd.f32 %v2079, %v1772
          %v2081 = vadd.f32 %v2080, %v1774
          %v2082 = vadd.f32 %v2081, %v1776
          %v2083 = vadd.f32 %v2082, %v1778
          %v2084 = vadd.f32 %v2083, %v1780
          %v2085 = vadd.f32 %v2084, %v1782
          %v2086 = vadd.f32 %v2085, %v1784
          %v2087 = vrot.slane %v2086, 4
          %v2088 = vadd.f32 %v2086, %v2087
          %v2089 = vrot.slane %v2088, 2
          %v2090 = vadd.f32 %v2088, %v2089
          %v2091 = vrot.slane %v2090, 1
          %v2092 = vadd.f32 %v2090, %v2091
          %v2093 = vadd.f32 %v1755, %v1757
          %v2094 = vadd.f32 %v2093, %v1759
          %v2095 = vadd.f32 %v2094, %v1761
          %v2096 = vadd.f32 %v2095, %v1763
          %v2097 = vadd.f32 %v2096, %v1765
          %v2098 = vadd.f32 %v2097, %v1767
          %v2099 = vadd.f32 %v2098, %v1769
          %v2100 = vadd.f32 %v2099, %v1771
          %v2101 = vadd.f32 %v2100, %v1773
          %v2102 = vadd.f32 %v2101, %v1775
          %v2103 = vadd.f32 %v2102, %v1777
          %v2104 = vadd.f32 %v2103, %v1779
          %v2105 = vadd.f32 %v2104, %v1781
          %v2106 = vadd.f32 %v2105, %v1783
          %v2107 = vadd.f32 %v2106, %v1785
          %v2108 = vrot.slane %v2107, 4
          %v2109 = vadd.f32 %v2107, %v2108
          %v2110 = vrot.slane %v2109, 2
          %v2111 = vadd.f32 %v2109, %v2110
          %v2112 = vrot.slane %v2111, 1
          %v2113 = vadd.f32 %v2111, %v2112
          %v2114 = vadd.f32 %v1786, %v1788
          %v2115 = vadd.f32 %v2114, %v1790
          %v2116 = vadd.f32 %v2115, %v1792
          %v2117 = vadd.f32 %v2116, %v1794
          %v2118 = vadd.f32 %v2117, %v1796
          %v2119 = vadd.f32 %v2118, %v1798
          %v2120 = vadd.f32 %v2119, %v1800
          %v2121 = vadd.f32 %v2120, %v1802
          %v2122 = vadd.f32 %v2121, %v1804
          %v2123 = vadd.f32 %v2122, %v1806
          %v2124 = vadd.f32 %v2123, %v1808
          %v2125 = vadd.f32 %v2124, %v1810
          %v2126 = vadd.f32 %v2125, %v1812
          %v2127 = vadd.f32 %v2126, %v1814
          %v2128 = vadd.f32 %v2127, %v1816
          %v2129 = vrot.slane %v2128, 4
          %v2130 = vadd.f32 %v2128, %v2129
          %v2131 = vrot.slane %v2130, 2
          %v2132 = vadd.f32 %v2130, %v2131
          %v2133 = vrot.slane %v2132, 1
          %v2134 = vadd.f32 %v2132, %v2133
          %v2135 = vadd.f32 %v1787, %v1789
          %v2136 = vadd.f32 %v2135, %v1791
          %v2137 = vadd.f32 %v2136, %v1793
          %v2138 = vadd.f32 %v2137, %v1795
          %v2139 = vadd.f32 %v2138, %v1797
          %v2140 = vadd.f32 %v2139, %v1799
          %v2141 = vadd.f32 %v2140, %v1801
          %v2142 = vadd.f32 %v2141, %v1803
          %v2143 = vadd.f32 %v2142, %v1805
          %v2144 = vadd.f32 %v2143, %v1807
          %v2145 = vadd.f32 %v2144, %v1809
          %v2146 = vadd.f32 %v2145, %v1811
          %v2147 = vadd.f32 %v2146, %v1813
          %v2148 = vadd.f32 %v2147, %v1815
          %v2149 = vadd.f32 %v2148, %v1817
          %v2150 = vrot.slane %v2149, 4
          %v2151 = vadd.f32 %v2149, %v2150
          %v2152 = vrot.slane %v2151, 2
          %v2153 = vadd.f32 %v2151, %v2152
          %v2154 = vrot.slane %v2153, 1
          %v2155 = vadd.f32 %v2153, %v2154
          %vm2172 = vcmask 1041409
          %v2173 = vsel %vm2172, %v1882, %v1840
          %vm2174 = vcmask 1042434
          %v2175 = vsel %vm2174, %v1924, %v2173
          %vm2176 = vcmask 1043459
          %v2177 = vsel %vm2176, %v1966, %v2175
          %vm2178 = vcmask 1044484
          %v2179 = vsel %vm2178, %v2008, %v2177
          %vm2180 = vcmask 1045509
          %v2181 = vsel %vm2180, %v2050, %v2179
          %vm2182 = vcmask 1046534
          %v2183 = vsel %vm2182, %v2092, %v2181
          %vm2184 = vcmask 1047559
          %v2185 = vsel %vm2184, %v2134, %v2183
          %v2186 = vsel %vm2172, %v1903, %v1861
          %v2187 = vsel %vm2174, %v1945, %v2186
          %v2188 = vsel %vm2176, %v1987, %v2187
          %v2189 = vsel %vm2178, %v2029, %v2188
          %v2190 = vsel %vm2180, %v2071, %v2189
          %v2191 = vsel %vm2182, %v2113, %v2190
          %v2192 = vsel %vm2184, %v2155, %v2191
          %v2195 = vadd.f32 %v1818, %v2185
          %v2196 = vadd.f32 %v1819, %v2192
          %2197 = vst [vmem:[#allocation2] sm:$0xff] %v2195
          %2198 = vst [vmem:[#allocation2 + $0x8] sm:$0xff] %v2196
          %v2199 = vld [vmem:[#allocation2] sm:$0xff]
          %v2200 = vld [vmem:[#allocation2 + $0x8] sm:$0xff]
          %v2201 = vmul.f32 %v2199, 0.0052083335
          %v2202 = vmul.f32 %v2200, 0.0052083335
          %v2203 = vld [vmem:[#allocation7] sm:$0xff]
          %v2204 = vld [vmem:[#allocation7 + $0x8] sm:$0xff]
          %v2205 = vld [vmem:[#allocation7 + $0x10] sm:$0xff]
          %v2206 = vld [vmem:[#allocation7 + $0x18] sm:$0xff]
          %v2207 = vld [vmem:[#allocation7 + $0x20] sm:$0xff]
          %v2208 = vld [vmem:[#allocation7 + $0x28] sm:$0xff]
          %v2209 = vld [vmem:[#allocation7 + $0x30] sm:$0xff]
          %v2210 = vld [vmem:[#allocation7 + $0x38] sm:$0xff]
          %v2211 = vld [vmem:[#allocation7 + $0x40] sm:$0xff]
          %v2212 = vld [vmem:[#allocation7 + $0x48] sm:$0xff]
          %v2213 = vld [vmem:[#allocation7 + $0x50] sm:$0xff]
          %v2214 = vld [vmem:[#allocation7 + $0x58] sm:$0xff]
          %v2215 = vld [vmem:[#allocation7 + $0x60] sm:$0xff]
          %v2216 = vld [vmem:[#allocation7 + $0x68] sm:$0xff]
          %v2217 = vld [vmem:[#allocation7 + $0x70] sm:$0xff]
          %v2218 = vld [vmem:[#allocation7 + $0x78] sm:$0xff]
          %v2219 = vld [vmem:[#allocation7 + $0x80] sm:$0xff]
          %v2220 = vld [vmem:[#allocation7 + $0x88] sm:$0xff]
          %v2221 = vld [vmem:[#allocation7 + $0x90] sm:$0xff]
          %v2222 = vld [vmem:[#allocation7 + $0x98] sm:$0xff]
          %v2223 = vld [vmem:[#allocation7 + $0xa0] sm:$0xff]
          %v2224 = vld [vmem:[#allocation7 + $0xa8] sm:$0xff]
          %v2225 = vld [vmem:[#allocation7 + $0xb0] sm:$0xff]
          %v2226 = vld [vmem:[#allocation7 + $0xb8] sm:$0xff]
          %v2227 = vld [vmem:[#allocation7 + $0xc0] sm:$0xff]
          %v2228 = vld [vmem:[#allocation7 + $0xc8] sm:$0xff]
          %v2229 = vld [vmem:[#allocation7 + $0xd0] sm:$0xff]
          %v2230 = vld [vmem:[#allocation7 + $0xd8] sm:$0xff]
          %v2231 = vld [vmem:[#allocation7 + $0xe0] sm:$0xff]
          %v2232 = vld [vmem:[#allocation7 + $0xe8] sm:$0xff]
          %v2233 = vld [vmem:[#allocation7 + $0xf0] sm:$0xff]
          %v2234 = vld [vmem:[#allocation7 + $0xf8] sm:$0xff]
          %v2235 = vld [vmem:[%s2] sm:$0x1]
          %v2237 = vperm.slane %v2235, 0
          %2239 = vmatpush.msra.mxu0 %v2218
          %2240 = vmatpush.msra.mxu0 %v2217
          %2241 = vmatpush.msra.mxu0 %v2216
          %2242 = vmatpush.msra.mxu0 %v2215
          %2243 = vmatpush.msra.mxu0 %v2214
          %2244 = vmatpush.msra.mxu0 %v2213
          %2245 = vmatpush.msra.mxu0 %v2212
          %2246 = vmatpush.msra.mxu0 %v2211
          %2247 = vmatpush.msra.mxu0 %v2210
          %2248 = vmatpush.msra.mxu0 %v2209
          %2249 = vmatpush.msra.mxu0 %v2208
          %2250 = vmatpush.msra.mxu0 %v2207
          %2251 = vmatpush.msra.mxu0 %v2206
          %2252 = vmatpush.msra.mxu0 %v2205
          %2253 = vmatpush.msra.mxu0 %v2204
          %2254 = vmatpush.msra.mxu0 %v2203
          %2255 = vmatmul.f32.gmra.mxu0 %v2201
          %v2256 = vpop.f32.mrf.mxu0
          %v2257 = vadd.f32 %v2237, %v2256
          %2258 = vdwg.mxu0
          %2259 = vmatpush.msra.mxu0 %v2234
          %2260 = vmatpush.msra.mxu0 %v2233
          %2261 = vmatpush.msra.mxu0 %v2232
          %2262 = vmatpush.msra.mxu0 %v2231
          %2263 = vmatpush.msra.mxu0 %v2230
          %2264 = vmatpush.msra.mxu0 %v2229
          %2265 = vmatpush.msra.mxu0 %v2228
          %2266 = vmatpush.msra.mxu0 %v2227
          %2267 = vmatpush.msra.mxu0 %v2226
          %2268 = vmatpush.msra.mxu0 %v2225
          %2269 = vmatpush.msra.mxu0 %v2224
          %2270 = vmatpush.msra.mxu0 %v2223
          %2271 = vmatpush.msra.mxu0 %v2222
          %2272 = vmatpush.msra.mxu0 %v2221
          %2273 = vmatpush.msra.mxu0 %v2220
          %2274 = vmatpush.msra.mxu0 %v2219
          %2275 = vmatmul.f32.gmra.mxu0 %v2202
          %v2276 = vpop.f32.mrf.mxu0
          %v2277 = vadd.f32 %v2257, %v2276
          %2278 = vdwg.mxu0
          %v2279 = vmax.f32 %v2277, 0.0
          %v2280 = vld [vmem:[%s3] sm:$0x1]
          %v2282 = vperm.slane %v2280, 0
          %v2284 = vmul.f32 %v2279, %v2282
          %2285 = vadd.xlane.f32.xlu0 %v2284
          %v2286 = vpop.xlane.xlu0 %2285
          %v2287 = vld [vmem:[#allocation3] sm:$0x1]
          %v2289 = vperm.slane %v2287, 0
          %v2291 = vadd.f32 %v2286, %v2289
          %2293 = vset.pattern.permute.xlu0 0
          %2294 = vperm.xlu0 %2293, %v2291
          %v2295 = vpop.permute.xlu0 %2294
          %2297 = vst [vmem:[#allocation9] sm:$0xff] %v2295
        $region60: #{tpu_custom_call.1} parent=39 // pred_fallthru
          _
        // Predicated region
        $region61: #{tpu_custom_call.1} parent=39 // pred_check
          %p2298 = pneg %p165
        $region62: #{tpu_custom_call.1} parent=39 // pred_check_branch
          %2300 = sbr.rel (%p2298) target = $region64
        $region63: #{tpu_custom_call.1} parent=39 // pred_region
          %2302 = vsyncadd [#allocation6], 0
          %s2303 = smul.addr %s27, 8
          %s2304 = scalar_lea.hbm %s5, %s2303
          %s2306 = sshll.u32 [#allocation9], 4
          %s2307 = int_to_ptr.vmem [resolvable:$true] %s2306
          %s2308 = sshll.u32 %s2304, 4
          %s2309 = int_to_ptr.hbm [resolvable:$true] %s2308
          %2311 = dma.vmem_to_hbm [thread:$0]  %s2307, 128, %s2309, [#allocation6]
        $region64: #{tpu_custom_call.1} parent=39 // pred_fallthru
          _
        // Predicated region
        $region65: #{tpu_custom_call.1} parent=39 // pred_check
          %p2312 = pneg %p165
        $region66: #{tpu_custom_call.1} parent=39 // pred_check_branch
          %2314 = sbr.rel (%p2312) target = $region68
        $region67: #{tpu_custom_call.1} parent=39 // pred_region
          %2316 = dma.done [#allocation6], 128
        $region68: #{tpu_custom_call.1} parent=39 // pred_fallthru
          _
      $region40: #{tpu_custom_call.1} parent=5 // pred_fallthru
        _
      %p2317 = scmp.le.s32.totalorder 2, %s18
      // Predicated region
      $region69: #{tpu_custom_call.1} parent=5 // pred_check
        %p2318 = pneg %p2317
      $region70: #{tpu_custom_call.1} parent=5 // pred_check_branch
        %2320 = sbr.rel (%p2318) target = $region72
      $region71: #{tpu_custom_call.1} parent=5 // pred_region
        %s2321 = ssub.s32 %s18, 2
      $region72: #{tpu_custom_call.1} parent=5 // pred_fallthru
        _
    $region6: #{tpu_custom_call.1} parent=1 // loop_footer
      %s22 = sadd.s32 1, %s18
    $region7: #{tpu_custom_call.1} parent=1 // loop_footer_branch
      %17 = sbr.rel target = $region3
    $region8: #{tpu_custom_call.1} parent=1 // loop_exit
      _
    %2322 = vsyncpa [#allocation5], 1
    %s2323 = scalar_lea.sflag [#allocation5], 1
    %2324 = vsyncpa %s2323, 1
    %2325 = vsyncpa [#allocation8], 1
    %2326 = vsyncpa [#allocation6], 1
    %s2327 = scalar_lea.sflag [#allocation6], 1
    %2328 = vsyncpa %s2327, 1

</llo_original>
